<compile_context>
chip_gen: v5e
topology: v5e:2x2
jax: 0.10.0
libtpu: 0.0.40
codegen_flags: <defaults>
</compile_context>

<pallas_src>
import jax
import jax.numpy as jnp
from jax.experimental import pallas as pl
from jax.experimental.pallas import tpu as pltpu

_LANES = 128


def _round_up(x, m):
    return ((x + m - 1) // m) * m


def _sublane_multiple(dtype):
    # f32 -> 8, bf16 -> 16, int8 -> 32 (sub-32-bit dtypes pack along sublanes).
    return max(8, 32 // jnp.dtype(dtype).itemsize)


# ---------------------------------------------------------------------------
# Path 1: natural (T, K, A) layout — no relayout, single HBM pass.
# ---------------------------------------------------------------------------
def _glm_natural_kernel(x_ref, theta_ref, r_ref):
    # x_ref:     VMEM (tile_t, K, A)  f32 / bf16
    # theta_ref: VMEM (1, 1, A)       f32
    # r_ref:     VMEM (tile_t, K)     f32
    x = x_ref[...].astype(jnp.float32)
    # VPU multiply (theta broadcast over leading dims) + XLU lane-reduce over A.
    u = jnp.sum(x * theta_ref[...], axis=-1)
    r_ref[...] = jnp.exp(u)  # EUP


def glm_forward(dt, X, theta, *, vmem_budget_bytes=24 * 1024 * 1024):
    """TorchGLM.forward on the natural (T, K, A) layout (no wrapper-side relayout).

    dt is accepted for API parity with the torch module but unused (as in torch).
    """
    del dt  # unused in forward, matching the torch module
    T, K, A = X.shape
    in_itemsize = jnp.dtype(X.dtype).itemsize
    sub_in = _sublane_multiple(X.dtype)

    # VMEM bytes per t-row: input tile (K sublane-padded, A lane-padded to 128)
    # plus the f32 output tile (K lane-padded to 128).
    lanes_a = _round_up(A, _LANES)
    in_per_t = _round_up(K, sub_in) * lanes_a * in_itemsize
    out_per_t = _round_up(K, _LANES) * 4
    per_t = in_per_t + out_per_t

    # Biggest block that fits the double-buffered budget; no forced splitting
    # (the grid is a serial loop on 1-TC chips, each step costs ~0.35 us).
    max_tile_t = max(8, (vmem_budget_bytes // (2 * per_t)) // 8 * 8)
    if T <= max_tile_t:
        tile_t = T          # single full-extent block (legal for any T)
    else:
        tile_t = max_tile_t  # multiple of 8; ragged last block is masked by Pallas

    grid = (pl.cdiv(T, tile_t),)
    theta3 = theta.astype(jnp.float32).reshape(1, 1, A)

    # Derived scoped-VMEM limit: double-buffered blocks + theta tile + slack.
    vmem_limit = int(2 * (tile_t * per_t + 8 * lanes_a * 4) + (4 << 20))

    return pl.pallas_call(
        _glm_natural_kernel,
        out_shape=jax.ShapeDtypeStruct((T, K), jnp.float32),
        grid_spec=pltpu.PrefetchScalarGridSpec(
            num_scalar_prefetch=0,
            grid=grid,
            in_specs=[
                pl.BlockSpec((tile_t, K, A), lambda i: (i, 0, 0)),
                pl.BlockSpec((1, 1, A), lambda i: (0, 0, 0)),
            ],
            out_specs=pl.BlockSpec((tile_t, K), lambda i: (i, 0)),
        ),
        compiler_params=pltpu.CompilerParams(
            dimension_semantics=("parallel",),
            vmem_limit_bytes=vmem_limit,
        ),
    )(X, theta3)


# ---------------------------------------------------------------------------
# Path 2: amortized lane-dense layout — prepare once, reuse across train epochs.
# ---------------------------------------------------------------------------
def prepare_X(X):
    """One-time lane-dense relayout (T, K, A) -> (A, R, 128).

    Call this ONCE per training run (X is reused across epochs in .train());
    the hot-path kernel then does a single near-roofline HBM pass per call.
    """
    T, K, A = X.shape
    N = T * K
    mult = _sublane_multiple(X.dtype)
    R = _round_up(pl.cdiv(N, _LANES), mult)
    n_pad = R * _LANES
    Xf = X.reshape(N, A)
    if n_pad != N:
        Xf = jnp.pad(Xf, ((0, n_pad - N), (0, 0)))
    return Xf.T.reshape(A, R, _LANES)


def _glm_lane_dense_kernel(theta_ref, x_ref, r_ref):
    # theta_ref: SMEM (A,)              f32
    # x_ref:     VMEM (A, tile_r, 128)  f32 / bf16
    # r_ref:     VMEM (tile_r, 128)     f32
    a_dim = x_ref.shape[0]
    # Per-feature scalar*vector accumulation: lane-dense VPU work only, no
    # cross-lane reduce, no materialized (A, tile_r, 128) product.
    # (Splitting into partial accumulators for ILP is unnecessary: DMA gives
    # ample slack per vreg — revisit only if a bundle dump shows vld/VALU binding.)
    acc = theta_ref[0] * x_ref[0].astype(jnp.float32)
    for a in range(1, a_dim):
        acc = acc + theta_ref[a] * x_ref[a].astype(jnp.float32)
    r_ref[...] = jnp.exp(acc)


def glm_forward_prepared(dt, Xt, theta, r_shape, *, vmem_budget_bytes=24 * 1024 * 1024):
    """Hot-path forward on a pre-laid-out Xt = prepare_X(X). Returns r of shape r_shape."""
    del dt  # unused in forward, matching the torch module
    A, R, lanes = Xt.shape
    assert lanes == _LANES, "Xt must come from prepare_X"
    T, K = r_shape
    N = T * K
    in_itemsize = jnp.dtype(Xt.dtype).itemsize
    mult = _sublane_multiple(Xt.dtype)

    # Budget-driven tile: bytes per row-of-128 lanes (A input rows + 1 f32 out row),
    # double-buffered by the BlockSpec pipeline.
    per_row = A * _LANES * in_itemsize + _LANES * 4
    max_tile_r = max(mult, (vmem_budget_bytes // (2 * per_row)) // mult * mult)
    tile_r = min(max_tile_r, R)
    # Mild core-aware split: only when each step keeps >= 512 rows of 128 lanes,
    # so v7x's 2 TCs both get work while 1-TC v5e/v6e pay at most one extra ~0.35 us
    # grid step.  Small problems stay a single big block.
    if tile_r == R and R >= 2 * 512:
        tile_r = _round_up(pl.cdiv(R, 2), mult)

    grid = (pl.cdiv(R, tile_r),)
    vmem_limit = int(
        2 * (A * tile_r * _LANES * in_itemsize + tile_r * _LANES * 4) + (4 << 20))

    r_flat = pl.pallas_call(
        _glm_lane_dense_kernel,
        out_shape=jax.ShapeDtypeStruct((R, _LANES), jnp.float32),
        grid_spec=pltpu.PrefetchScalarGridSpec(
            num_scalar_prefetch=0,
            grid=grid,
            in_specs=[
                # theta as SMEM scalars (tiny; no padded VMEM tile).
                pl.BlockSpec(memory_space=pltpu.MemorySpace.SMEM),
                # Lane-dense X tile: last two dims (tile_r, 128) -> unmasked vld/vst.
                pl.BlockSpec((A, tile_r, _LANES), lambda i: (0, i, 0)),
            ],
            out_specs=pl.BlockSpec((tile_r, _LANES), lambda i: (i, 0)),
        ),
        compiler_params=pltpu.CompilerParams(
            dimension_semantics=("parallel",),
            vmem_limit_bytes=vmem_limit,
        ),
    )(theta.astype(jnp.float32), Xt)

    # Cheap unpad/reshape of the (small, f32) output only.
    return r_flat.reshape(R * _LANES)[:N].reshape(T, K)


def make_params(u0, n_kappa, n_eta, key):
    """Deterministic synthetic parameters matching TorchGLM.__init__ / get_params."""
    k1, k2 = jax.random.split(key)
    b = jnp.asarray([u0], dtype=jnp.float32)                      # (1,)
    kappa_coefs = 0.1 * jax.random.normal(k1, (n_kappa,), jnp.float32)
    eta_coefs = 0.1 * jax.random.normal(k2, (n_eta,), jnp.float32)
    return jnp.concatenate([b, kappa_coefs, eta_coefs], axis=0)   # (1+n_kappa+n_eta,)


if __name__ == "__main__":
    key = jax.random.PRNGKey(0)
    k_x, k_p = jax.random.split(key)

    # Small shapes consistent with the GLM design matrix X: (time, trials, features).
    T, K = 256, 8
    u0 = -1.0
    n_kappa, n_eta = 5, 6
    A = 1 + n_kappa + n_eta

    theta = make_params(u0, n_kappa, n_eta, k_p)
    X = 0.5 * jax.random.normal(k_x, (T, K, A), jnp.float32)
    dt = jnp.asarray([0.1], dtype=jnp.float32)  # unused in forward, as in torch

    r_ref = jnp.exp(jnp.einsum("tka,a->tk", X, theta, precision="highest"))

    # 1) Natural-layout kernel (X changes every call -> no relayout pass).
    r_nat = jax.block_until_ready(glm_forward(dt, X, theta))
    assert r_nat.shape == (T, K)
    assert jnp.allclose(r_nat, r_ref, rtol=1e-5, atol=1e-5), "natural path mismatch"

    # 2) Amortized lane-dense path (train() reuses X across epochs: prepare once).
    Xt = jax.block_until_ready(prepare_X(X))
    r_prep = jax.block_until_ready(glm_forward_prepared(dt, Xt, theta, (T, K)))
    assert jnp.allclose(r_prep, r_ref, rtol=1e-5, atol=1e-5), "prepared path mismatch"

    # 3) bf16 X halves the dominant HBM stream; accumulation stays f32 in-kernel.
    Xb = X.astype(jnp.bfloat16)
    r_ref_bf = jnp.exp(jnp.einsum("tka,a->tk", Xb.astype(jnp.float32), theta,
                                  precision="highest"))
    r_bf = jax.block_until_ready(glm_forward_prepared(dt, prepare_X(Xb), theta, (T, K)))
    assert jnp.allclose(r_bf, r_ref_bf, rtol=1e-4, atol=1e-4), "bf16 path mismatch"

    # 4) Shapes that don't match native tiles (T not a multiple of 8, N % 128 != 0).
    T2 = 100
    X2 = 0.5 * jax.random.normal(k_x, (T2, K, A), jnp.float32)
    r2_ref = jnp.exp(jnp.einsum("tka,a->tk", X2, theta, precision="highest"))
    r2_nat = jax.block_until_ready(glm_forward(dt, X2, theta))
    r2_prep = jax.block_until_ready(
        glm_forward_prepared(dt, prepare_X(X2), theta, (T2, K)))
    assert jnp.allclose(r2_nat, r2_ref, rtol=1e-5, atol=1e-5), "ragged natural mismatch"
    assert jnp.allclose(r2_prep, r2_ref, rtol=1e-5, atol=1e-5), "ragged prepared mismatch"

    # 5) Larger problem that exercises the multi-step grid (2 x 512-row tiles).
    T3 = 16384
    X3 = 0.25 * jax.random.normal(k_x, (T3, K, A), jnp.float32)
    r3_ref = jnp.exp(jnp.einsum("tka,a->tk", X3, theta, precision="highest"))
    r3 = jax.block_until_ready(glm_forward_prepared(dt, prepare_X(X3), theta, (T3, K)))
    assert jnp.allclose(r3, r3_ref, rtol=1e-5, atol=1e-5), "multi-step mismatch"

    print("KERNEL_OK")
</pallas_src>

<mosaic_0001>
module attributes {stable_mosaic.version = 11 : i64} {
  func.func @_glm_natural_kernel(%arg0: i32, %arg1: memref<256x8x12xf32, #tpu.memory_space<vmem>>, %arg2: memref<1x1x12xf32, #tpu.memory_space<vmem>>, %arg3: memref<256x8xf32, #tpu.memory_space<vmem>>) attributes {dimension_semantics = [#tpu.dimension_semantics<parallel>], iteration_bounds = array<i64: 1>, scalar_prefetch = 0 : i64, scratch_operands = 0 : i64, tpu.core_type = #tpu.core_type<tc>, window_params = [{transform_indices = @transform_0, window_bounds = array<i64: 256, 8, 12>}, {pipeline_mode = #tpu.pipeline_mode<synchronous>, transform_indices = @transform_1, window_bounds = array<i64: 1, 1, 12>}, {transform_indices = @transform_2, window_bounds = array<i64: 256, 8>}]} {
    %c0 = arith.constant 0 : index
    %c0_0 = arith.constant 0 : index
    %c0_1 = arith.constant 0 : index
    %0 = vector.load %arg1[%c0, %c0_0, %c0_1] : memref<256x8x12xf32, #tpu.memory_space<vmem>>, vector<256x8x12xf32>
    %c0_2 = arith.constant 0 : index
    %c0_3 = arith.constant 0 : index
    %c0_4 = arith.constant 0 : index
    %1 = vector.load %arg2[%c0_2, %c0_3, %c0_4] : memref<1x1x12xf32, #tpu.memory_space<vmem>>, vector<1x1x12xf32>
    %2 = vector.broadcast %1 : vector<1x1x12xf32> to vector<256x8x12xf32>
    %3 = arith.mulf %0, %2 : vector<256x8x12xf32>
    %cst = arith.constant dense<0.000000e+00> : vector<256x8xf32>
    %4 = vector.multi_reduction <add>, %3, %cst [2] : vector<256x8x12xf32> to vector<256x8xf32>
    %5 = math.exp %4 : vector<256x8xf32>
    %c0_5 = arith.constant 0 : index
    %c0_6 = arith.constant 0 : index
    %6 = vector.load %arg3[%c0_5, %c0_6] : memref<256x8xf32, #tpu.memory_space<vmem>>, vector<256x8xf32>
    tpu.vector_store %arg3[%c0_5, %c0_6], %5 {strides = array<i32>} : memref<256x8xf32, #tpu.memory_space<vmem>>, vector<256x8xf32>,
    return
  }
  func.func @transform_0(%arg0: i32) -> (i32, i32, i32) {
    %c0_i32 = arith.constant 0 : i32
    %c0_i32_0 = arith.constant 0 : i32
    %c0_i32_1 = arith.constant 0 : i32
    return %arg0, %c0_i32, %c0_i32_0 : i32, i32, i32
  }
  func.func @transform_1(%arg0: i32) -> (i32, i32, i32) {
    %c0_i32 = arith.constant 0 : i32
    %c0_i32_0 = arith.constant 0 : i32
    %c0_i32_1 = arith.constant 0 : i32
    %c0_i32_2 = arith.constant 0 : i32
    return %c0_i32, %c0_i32_0, %c0_i32_1 : i32, i32, i32
  }
  func.func @transform_2(%arg0: i32) -> (i32, i32) {
    %c0_i32 = arith.constant 0 : i32
    %c0_i32_0 = arith.constant 0 : i32
    return %arg0, %c0_i32 : i32, i32
  }
}

</mosaic_0001>

<llo_original>
// kernel: tpu_custom_call.1
$region0: #{tpu_custom_call.1}
  #allocation0 [shape = 'u32[]', space=smem, size = 0x4, offset = 0x4, fixed_abs, tag = 'smem constant byte address 0x4 - core index']
  #allocation1 [shape = 'u32[72,128]{1,0:T(1,128)}', space=vmem, size = 0x9000, scoped, tag = 'internal scratch']
  %s0 = inlined_call_operand.vmem [shape: f32[256,8,12], index: 0, kind: input, shape index: {}]
  %s1 = inlined_call_operand.vmem [shape: f32[1,1,12], index: 1, kind: input, shape index: {}]
  %s2 = inlined_call_operand.vmem [shape: f32[256,8], index: 2, kind: output, shape index: {}]
  %s3 = sld [smem:[#allocation0]]
  $region18: #{tpu_custom_call.1} parent=0
    _
  %s5 = ssub.s32 1, %s3
  %s6 = scalar_select 0, %s5, %s3
  // Predicated region
  $region2: #{tpu_custom_call.1} parent=0 // pred_check
    _
  $region3: #{tpu_custom_call.1} parent=0 // pred_check_branch
    %8 = sbr.rel (0) target = $region5
  $region4: #{tpu_custom_call.1} parent=0 // pred_region
    _
  $region5: #{tpu_custom_call.1} parent=0 // pred_fallthru
    _
  // Predicated region
  $region6: #{tpu_custom_call.1} parent=0 // pred_check
    _
  $region7: #{tpu_custom_call.1} parent=0 // pred_check_branch
    %10 = sbr.rel (0) target = $region9
  $region8: #{tpu_custom_call.1} parent=0 // pred_region
    _
  $region9: #{tpu_custom_call.1} parent=0 // pred_fallthru
    _
  %v11 = vld [vmem:[%s0] sm:$0xff]
  %v12 = vld [vmem:[%s0 + $0x8] sm:$0xff]
  %v13 = vld [vmem:[%s0 + $0x10] sm:$0xff]
  %v14 = vld [vmem:[%s0 + $0x18] sm:$0xff]
  %v15 = vld [vmem:[%s0 + $0x20] sm:$0xff]
  %v16 = vld [vmem:[%s0 + $0x28] sm:$0xff]
  %v17 = vld [vmem:[%s0 + $0x30] sm:$0xff]
  %v18 = vld [vmem:[%s0 + $0x38] sm:$0xff]
  %v19 = vld [vmem:[%s0 + $0x40] sm:$0xff]
  %v20 = vld [vmem:[%s0 + $0x48] sm:$0xff]
  %v21 = vld [vmem:[%s0 + $0x50] sm:$0xff]
  %v22 = vld [vmem:[%s0 + $0x58] sm:$0xff]
  %v23 = vld [vmem:[%s0 + $0x60] sm:$0xff]
  %v24 = vld [vmem:[%s0 + $0x68] sm:$0xff]
  %v25 = vld [vmem:[%s0 + $0x70] sm:$0xff]
  %v26 = vld [vmem:[%s0 + $0x78] sm:$0xff]
  %v27 = vld [vmem:[%s0 + $0x80] sm:$0xff]
  %v28 = vld [vmem:[%s0 + $0x88] sm:$0xff]
  %v29 = vld [vmem:[%s0 + $0x90] sm:$0xff]
  %v30 = vld [vmem:[%s0 + $0x98] sm:$0xff]
  %v31 = vld [vmem:[%s0 + $0xa0] sm:$0xff]
  %v32 = vld [vmem:[%s0 + $0xa8] sm:$0xff]
  %v33 = vld [vmem:[%s0 + $0xb0] sm:$0xff]
  %v34 = vld [vmem:[%s0 + $0xb8] sm:$0xff]
  %v35 = vld [vmem:[%s0 + $0xc0] sm:$0xff]
  %v36 = vld [vmem:[%s0 + $0xc8] sm:$0xff]
  %v37 = vld [vmem:[%s0 + $0xd0] sm:$0xff]
  %v38 = vld [vmem:[%s0 + $0xd8] sm:$0xff]
  %v39 = vld [vmem:[%s0 + $0xe0] sm:$0xff]
  %v40 = vld [vmem:[%s0 + $0xe8] sm:$0xff]
  %v41 = vld [vmem:[%s0 + $0xf0] sm:$0xff]
  %v42 = vld [vmem:[%s0 + $0xf8] sm:$0xff]
  %v43 = vld [vmem:[%s0 + $0x100] sm:$0xff]
  %v44 = vld [vmem:[%s0 + $0x108] sm:$0xff]
  %v45 = vld [vmem:[%s0 + $0x110] sm:$0xff]
  %v46 = vld [vmem:[%s0 + $0x118] sm:$0xff]
  %v47 = vld [vmem:[%s0 + $0x120] sm:$0xff]
  %v48 = vld [vmem:[%s0 + $0x128] sm:$0xff]
  %v49 = vld [vmem:[%s0 + $0x130] sm:$0xff]
  %v50 = vld [vmem:[%s0 + $0x138] sm:$0xff]
  %v51 = vld [vmem:[%s0 + $0x140] sm:$0xff]
  %v52 = vld [vmem:[%s0 + $0x148] sm:$0xff]
  %v53 = vld [vmem:[%s0 + $0x150] sm:$0xff]
  %v54 = vld [vmem:[%s0 + $0x158] sm:$0xff]
  %v55 = vld [vmem:[%s0 + $0x160] sm:$0xff]
  %v56 = vld [vmem:[%s0 + $0x168] sm:$0xff]
  %v57 = vld [vmem:[%s0 + $0x170] sm:$0xff]
  %v58 = vld [vmem:[%s0 + $0x178] sm:$0xff]
  %v59 = vld [vmem:[%s0 + $0x180] sm:$0xff]
  %v60 = vld [vmem:[%s0 + $0x188] sm:$0xff]
  %v61 = vld [vmem:[%s0 + $0x190] sm:$0xff]
  %v62 = vld [vmem:[%s0 + $0x198] sm:$0xff]
  %v63 = vld [vmem:[%s0 + $0x1a0] sm:$0xff]
  %v64 = vld [vmem:[%s0 + $0x1a8] sm:$0xff]
  %v65 = vld [vmem:[%s0 + $0x1b0] sm:$0xff]
  %v66 = vld [vmem:[%s0 + $0x1b8] sm:$0xff]
  %v67 = vld [vmem:[%s0 + $0x1c0] sm:$0xff]
  %v68 = vld [vmem:[%s0 + $0x1c8] sm:$0xff]
  %v69 = vld [vmem:[%s0 + $0x1d0] sm:$0xff]
  %v70 = vld [vmem:[%s0 + $0x1d8] sm:$0xff]
  %v71 = vld [vmem:[%s0 + $0x1e0] sm:$0xff]
  %v72 = vld [vmem:[%s0 + $0x1e8] sm:$0xff]
  %v73 = vld [vmem:[%s0 + $0x1f0] sm:$0xff]
  %v74 = vld [vmem:[%s0 + $0x1f8] sm:$0xff]
  %v75 = vld [vmem:[%s0 + $0x200] sm:$0xff]
  %v76 = vld [vmem:[%s0 + $0x208] sm:$0xff]
  %v77 = vld [vmem:[%s0 + $0x210] sm:$0xff]
  %v78 = vld [vmem:[%s0 + $0x218] sm:$0xff]
  %v79 = vld [vmem:[%s0 + $0x220] sm:$0xff]
  %v80 = vld [vmem:[%s0 + $0x228] sm:$0xff]
  %v81 = vld [vmem:[%s0 + $0x230] sm:$0xff]
  %v82 = vld [vmem:[%s0 + $0x238] sm:$0xff]
  %v83 = vld [vmem:[%s0 + $0x240] sm:$0xff]
  %v84 = vld [vmem:[%s0 + $0x248] sm:$0xff]
  %v85 = vld [vmem:[%s0 + $0x250] sm:$0xff]
  %v86 = vld [vmem:[%s0 + $0x258] sm:$0xff]
  %v87 = vld [vmem:[%s0 + $0x260] sm:$0xff]
  %v88 = vld [vmem:[%s0 + $0x268] sm:$0xff]
  %v89 = vld [vmem:[%s0 + $0x270] sm:$0xff]
  %v90 = vld [vmem:[%s0 + $0x278] sm:$0xff]
  %v91 = vld [vmem:[%s0 + $0x280] sm:$0xff]
  %v92 = vld [vmem:[%s0 + $0x288] sm:$0xff]
  %v93 = vld [vmem:[%s0 + $0x290] sm:$0xff]
  %v94 = vld [vmem:[%s0 + $0x298] sm:$0xff]
  %v95 = vld [vmem:[%s0 + $0x2a0] sm:$0xff]
  %v96 = vld [vmem:[%s0 + $0x2a8] sm:$0xff]
  %v97 = vld [vmem:[%s0 + $0x2b0] sm:$0xff]
  %v98 = vld [vmem:[%s0 + $0x2b8] sm:$0xff]
  %v99 = vld [vmem:[%s0 + $0x2c0] sm:$0xff]
  %v100 = vld [vmem:[%s0 + $0x2c8] sm:$0xff]
  %v101 = vld [vmem:[%s0 + $0x2d0] sm:$0xff]
  %v102 = vld [vmem:[%s0 + $0x2d8] sm:$0xff]
  %v103 = vld [vmem:[%s0 + $0x2e0] sm:$0xff]
  %v104 = vld [vmem:[%s0 + $0x2e8] sm:$0xff]
  %v105 = vld [vmem:[%s0 + $0x2f0] sm:$0xff]
  %v106 = vld [vmem:[%s0 + $0x2f8] sm:$0xff]
  %v107 = vld [vmem:[%s0 + $0x300] sm:$0xff]
  %v108 = vld [vmem:[%s0 + $0x308] sm:$0xff]
  %v109 = vld [vmem:[%s0 + $0x310] sm:$0xff]
  %v110 = vld [vmem:[%s0 + $0x318] sm:$0xff]
  %v111 = vld [vmem:[%s0 + $0x320] sm:$0xff]
  %v112 = vld [vmem:[%s0 + $0x328] sm:$0xff]
  %v113 = vld [vmem:[%s0 + $0x330] sm:$0xff]
  %v114 = vld [vmem:[%s0 + $0x338] sm:$0xff]
  %v115 = vld [vmem:[%s0 + $0x340] sm:$0xff]
  %v116 = vld [vmem:[%s0 + $0x348] sm:$0xff]
  %v117 = vld [vmem:[%s0 + $0x350] sm:$0xff]
  %v118 = vld [vmem:[%s0 + $0x358] sm:$0xff]
  %v119 = vld [vmem:[%s0 + $0x360] sm:$0xff]
  %v120 = vld [vmem:[%s0 + $0x368] sm:$0xff]
  %v121 = vld [vmem:[%s0 + $0x370] sm:$0xff]
  %v122 = vld [vmem:[%s0 + $0x378] sm:$0xff]
  %v123 = vld [vmem:[%s0 + $0x380] sm:$0xff]
  %v124 = vld [vmem:[%s0 + $0x388] sm:$0xff]
  %v125 = vld [vmem:[%s0 + $0x390] sm:$0xff]
  %v126 = vld [vmem:[%s0 + $0x398] sm:$0xff]
  %v127 = vld [vmem:[%s0 + $0x3a0] sm:$0xff]
  %v128 = vld [vmem:[%s0 + $0x3a8] sm:$0xff]
  %v129 = vld [vmem:[%s0 + $0x3b0] sm:$0xff]
  %v130 = vld [vmem:[%s0 + $0x3b8] sm:$0xff]
  %v131 = vld [vmem:[%s0 + $0x3c0] sm:$0xff]
  %v132 = vld [vmem:[%s0 + $0x3c8] sm:$0xff]
  %v133 = vld [vmem:[%s0 + $0x3d0] sm:$0xff]
  %v134 = vld [vmem:[%s0 + $0x3d8] sm:$0xff]
  %v135 = vld [vmem:[%s0 + $0x3e0] sm:$0xff]
  %v136 = vld [vmem:[%s0 + $0x3e8] sm:$0xff]
  %v137 = vld [vmem:[%s0 + $0x3f0] sm:$0xff]
  %v138 = vld [vmem:[%s0 + $0x3f8] sm:$0xff]
  %v139 = vld [vmem:[%s0 + $0x400] sm:$0xff]
  %v140 = vld [vmem:[%s0 + $0x408] sm:$0xff]
  %v141 = vld [vmem:[%s0 + $0x410] sm:$0xff]
  %v142 = vld [vmem:[%s0 + $0x418] sm:$0xff]
  %v143 = vld [vmem:[%s0 + $0x420] sm:$0xff]
  %v144 = vld [vmem:[%s0 + $0x428] sm:$0xff]
  %v145 = vld [vmem:[%s0 + $0x430] sm:$0xff]
  %v146 = vld [vmem:[%s0 + $0x438] sm:$0xff]
  %v147 = vld [vmem:[%s0 + $0x440] sm:$0xff]
  %v148 = vld [vmem:[%s0 + $0x448] sm:$0xff]
  %v149 = vld [vmem:[%s0 + $0x450] sm:$0xff]
  %v150 = vld [vmem:[%s0 + $0x458] sm:$0xff]
  %v151 = vld [vmem:[%s0 + $0x460] sm:$0xff]
  %v152 = vld [vmem:[%s0 + $0x468] sm:$0xff]
  %v153 = vld [vmem:[%s0 + $0x470] sm:$0xff]
  %v154 = vld [vmem:[%s0 + $0x478] sm:$0xff]
  %v155 = vld [vmem:[%s0 + $0x480] sm:$0xff]
  %v156 = vld [vmem:[%s0 + $0x488] sm:$0xff]
  %v157 = vld [vmem:[%s0 + $0x490] sm:$0xff]
  %v158 = vld [vmem:[%s0 + $0x498] sm:$0xff]
  %v159 = vld [vmem:[%s0 + $0x4a0] sm:$0xff]
  %v160 = vld [vmem:[%s0 + $0x4a8] sm:$0xff]
  %v161 = vld [vmem:[%s0 + $0x4b0] sm:$0xff]
  %v162 = vld [vmem:[%s0 + $0x4b8] sm:$0xff]
  %v163 = vld [vmem:[%s0 + $0x4c0] sm:$0xff]
  %v164 = vld [vmem:[%s0 + $0x4c8] sm:$0xff]
  %v165 = vld [vmem:[%s0 + $0x4d0] sm:$0xff]
  %v166 = vld [vmem:[%s0 + $0x4d8] sm:$0xff]
  %v167 = vld [vmem:[%s0 + $0x4e0] sm:$0xff]
  %v168 = vld [vmem:[%s0 + $0x4e8] sm:$0xff]
  %v169 = vld [vmem:[%s0 + $0x4f0] sm:$0xff]
  %v170 = vld [vmem:[%s0 + $0x4f8] sm:$0xff]
  %v171 = vld [vmem:[%s0 + $0x500] sm:$0xff]
  %v172 = vld [vmem:[%s0 + $0x508] sm:$0xff]
  %v173 = vld [vmem:[%s0 + $0x510] sm:$0xff]
  %v174 = vld [vmem:[%s0 + $0x518] sm:$0xff]
  %v175 = vld [vmem:[%s0 + $0x520] sm:$0xff]
  %v176 = vld [vmem:[%s0 + $0x528] sm:$0xff]
  %v177 = vld [vmem:[%s0 + $0x530] sm:$0xff]
  %v178 = vld [vmem:[%s0 + $0x538] sm:$0xff]
  %v179 = vld [vmem:[%s0 + $0x540] sm:$0xff]
  %v180 = vld [vmem:[%s0 + $0x548] sm:$0xff]
  %v181 = vld [vmem:[%s0 + $0x550] sm:$0xff]
  %v182 = vld [vmem:[%s0 + $0x558] sm:$0xff]
  %v183 = vld [vmem:[%s0 + $0x560] sm:$0xff]
  %v184 = vld [vmem:[%s0 + $0x568] sm:$0xff]
  %v185 = vld [vmem:[%s0 + $0x570] sm:$0xff]
  %v186 = vld [vmem:[%s0 + $0x578] sm:$0xff]
  %v187 = vld [vmem:[%s0 + $0x580] sm:$0xff]
  %v188 = vld [vmem:[%s0 + $0x588] sm:$0xff]
  %v189 = vld [vmem:[%s0 + $0x590] sm:$0xff]
  %v190 = vld [vmem:[%s0 + $0x598] sm:$0xff]
  %v191 = vld [vmem:[%s0 + $0x5a0] sm:$0xff]
  %v192 = vld [vmem:[%s0 + $0x5a8] sm:$0xff]
  %v193 = vld [vmem:[%s0 + $0x5b0] sm:$0xff]
  %v194 = vld [vmem:[%s0 + $0x5b8] sm:$0xff]
  %v195 = vld [vmem:[%s0 + $0x5c0] sm:$0xff]
  %v196 = vld [vmem:[%s0 + $0x5c8] sm:$0xff]
  %v197 = vld [vmem:[%s0 + $0x5d0] sm:$0xff]
  %v198 = vld [vmem:[%s0 + $0x5d8] sm:$0xff]
  %v199 = vld [vmem:[%s0 + $0x5e0] sm:$0xff]
  %v200 = vld [vmem:[%s0 + $0x5e8] sm:$0xff]
  %v201 = vld [vmem:[%s0 + $0x5f0] sm:$0xff]
  %v202 = vld [vmem:[%s0 + $0x5f8] sm:$0xff]
  %v203 = vld [vmem:[%s0 + $0x600] sm:$0xff]
  %v204 = vld [vmem:[%s0 + $0x608] sm:$0xff]
  %v205 = vld [vmem:[%s0 + $0x610] sm:$0xff]
  %v206 = vld [vmem:[%s0 + $0x618] sm:$0xff]
  %v207 = vld [vmem:[%s0 + $0x620] sm:$0xff]
  %v208 = vld [vmem:[%s0 + $0x628] sm:$0xff]
  %v209 = vld [vmem:[%s0 + $0x630] sm:$0xff]
  %v210 = vld [vmem:[%s0 + $0x638] sm:$0xff]
  %v211 = vld [vmem:[%s0 + $0x640] sm:$0xff]
  %v212 = vld [vmem:[%s0 + $0x648] sm:$0xff]
  %v213 = vld [vmem:[%s0 + $0x650] sm:$0xff]
  %v214 = vld [vmem:[%s0 + $0x658] sm:$0xff]
  %v215 = vld [vmem:[%s0 + $0x660] sm:$0xff]
  %v216 = vld [vmem:[%s0 + $0x668] sm:$0xff]
  %v217 = vld [vmem:[%s0 + $0x670] sm:$0xff]
  %v218 = vld [vmem:[%s0 + $0x678] sm:$0xff]
  %v219 = vld [vmem:[%s0 + $0x680] sm:$0xff]
  %v220 = vld [vmem:[%s0 + $0x688] sm:$0xff]
  %v221 = vld [vmem:[%s0 + $0x690] sm:$0xff]
  %v222 = vld [vmem:[%s0 + $0x698] sm:$0xff]
  %v223 = vld [vmem:[%s0 + $0x6a0] sm:$0xff]
  %v224 = vld [vmem:[%s0 + $0x6a8] sm:$0xff]
  %v225 = vld [vmem:[%s0 + $0x6b0] sm:$0xff]
  %v226 = vld [vmem:[%s0 + $0x6b8] sm:$0xff]
  %v227 = vld [vmem:[%s0 + $0x6c0] sm:$0xff]
  %v228 = vld [vmem:[%s0 + $0x6c8] sm:$0xff]
  %v229 = vld [vmem:[%s0 + $0x6d0] sm:$0xff]
  %v230 = vld [vmem:[%s0 + $0x6d8] sm:$0xff]
  %v231 = vld [vmem:[%s0 + $0x6e0] sm:$0xff]
  %v232 = vld [vmem:[%s0 + $0x6e8] sm:$0xff]
  %v233 = vld [vmem:[%s0 + $0x6f0] sm:$0xff]
  %v234 = vld [vmem:[%s0 + $0x6f8] sm:$0xff]
  %v235 = vld [vmem:[%s0 + $0x700] sm:$0xff]
  %v236 = vld [vmem:[%s0 + $0x708] sm:$0xff]
  %v237 = vld [vmem:[%s0 + $0x710] sm:$0xff]
  %v238 = vld [vmem:[%s0 + $0x718] sm:$0xff]
  %v239 = vld [vmem:[%s0 + $0x720] sm:$0xff]
  %v240 = vld [vmem:[%s0 + $0x728] sm:$0xff]
  %v241 = vld [vmem:[%s0 + $0x730] sm:$0xff]
  %v242 = vld [vmem:[%s0 + $0x738] sm:$0xff]
  %v243 = vld [vmem:[%s0 + $0x740] sm:$0xff]
  %v244 = vld [vmem:[%s0 + $0x748] sm:$0xff]
  %v245 = vld [vmem:[%s0 + $0x750] sm:$0xff]
  %v246 = vld [vmem:[%s0 + $0x758] sm:$0xff]
  %v247 = vld [vmem:[%s0 + $0x760] sm:$0xff]
  %v248 = vld [vmem:[%s0 + $0x768] sm:$0xff]
  %v249 = vld [vmem:[%s0 + $0x770] sm:$0xff]
  %v250 = vld [vmem:[%s0 + $0x778] sm:$0xff]
  %v251 = vld [vmem:[%s0 + $0x780] sm:$0xff]
  %v252 = vld [vmem:[%s0 + $0x788] sm:$0xff]
  %v253 = vld [vmem:[%s0 + $0x790] sm:$0xff]
  %v254 = vld [vmem:[%s0 + $0x798] sm:$0xff]
  %v255 = vld [vmem:[%s0 + $0x7a0] sm:$0xff]
  %v256 = vld [vmem:[%s0 + $0x7a8] sm:$0xff]
  %v257 = vld [vmem:[%s0 + $0x7b0] sm:$0xff]
  %v258 = vld [vmem:[%s0 + $0x7b8] sm:$0xff]
  %v259 = vld [vmem:[%s0 + $0x7c0] sm:$0xff]
  %v260 = vld [vmem:[%s0 + $0x7c8] sm:$0xff]
  %v261 = vld [vmem:[%s0 + $0x7d0] sm:$0xff]
  %v262 = vld [vmem:[%s0 + $0x7d8] sm:$0xff]
  %v263 = vld [vmem:[%s0 + $0x7e0] sm:$0xff]
  %v264 = vld [vmem:[%s0 + $0x7e8] sm:$0xff]
  %v265 = vld [vmem:[%s0 + $0x7f0] sm:$0xff]
  %v266 = vld [vmem:[%s0 + $0x7f8] sm:$0xff]
  %v267 = vld [vmem:[%s1] sm:$0x1]
  %v269 = vperm.slane %v267, 0
  %v271 = vmul.f32 %v11, %v269
  %v272 = vmul.f32 %v12, %v269
  %v273 = vmul.f32 %v13, %v269
  %v274 = vmul.f32 %v14, %v269
  %v275 = vmul.f32 %v15, %v269
  %v276 = vmul.f32 %v16, %v269
  %v277 = vmul.f32 %v17, %v269
  %v278 = vmul.f32 %v18, %v269
  %v279 = vmul.f32 %v19, %v269
  %v280 = vmul.f32 %v20, %v269
  %v281 = vmul.f32 %v21, %v269
  %v282 = vmul.f32 %v22, %v269
  %v283 = vmul.f32 %v23, %v269
  %v284 = vmul.f32 %v24, %v269
  %v285 = vmul.f32 %v25, %v269
  %v286 = vmul.f32 %v26, %v269
  %v287 = vmul.f32 %v27, %v269
  %v288 = vmul.f32 %v28, %v269
  %v289 = vmul.f32 %v29, %v269
  %v290 = vmul.f32 %v30, %v269
  %v291 = vmul.f32 %v31, %v269
  %v292 = vmul.f32 %v32, %v269
  %v293 = vmul.f32 %v33, %v269
  %v294 = vmul.f32 %v34, %v269
  %v295 = vmul.f32 %v35, %v269
  %v296 = vmul.f32 %v36, %v269
  %v297 = vmul.f32 %v37, %v269
  %v298 = vmul.f32 %v38, %v269
  %v299 = vmul.f32 %v39, %v269
  %v300 = vmul.f32 %v40, %v269
  %v301 = vmul.f32 %v41, %v269
  %v302 = vmul.f32 %v42, %v269
  %v303 = vmul.f32 %v43, %v269
  %v304 = vmul.f32 %v44, %v269
  %v305 = vmul.f32 %v45, %v269
  %v306 = vmul.f32 %v46, %v269
  %v307 = vmul.f32 %v47, %v269
  %v308 = vmul.f32 %v48, %v269
  %v309 = vmul.f32 %v49, %v269
  %v310 = vmul.f32 %v50, %v269
  %v311 = vmul.f32 %v51, %v269
  %v312 = vmul.f32 %v52, %v269
  %v313 = vmul.f32 %v53, %v269
  %v314 = vmul.f32 %v54, %v269
  %v315 = vmul.f32 %v55, %v269
  %v316 = vmul.f32 %v56, %v269
  %v317 = vmul.f32 %v57, %v269
  %v318 = vmul.f32 %v58, %v269
  %v319 = vmul.f32 %v59, %v269
  %v320 = vmul.f32 %v60, %v269
  %v321 = vmul.f32 %v61, %v269
  %v322 = vmul.f32 %v62, %v269
  %v323 = vmul.f32 %v63, %v269
  %v324 = vmul.f32 %v64, %v269
  %v325 = vmul.f32 %v65, %v269
  %v326 = vmul.f32 %v66, %v269
  %v327 = vmul.f32 %v67, %v269
  %v328 = vmul.f32 %v68, %v269
  %v329 = vmul.f32 %v69, %v269
  %v330 = vmul.f32 %v70, %v269
  %v331 = vmul.f32 %v71, %v269
  %v332 = vmul.f32 %v72, %v269
  %v333 = vmul.f32 %v73, %v269
  %v334 = vmul.f32 %v74, %v269
  %v335 = vmul.f32 %v75, %v269
  %v336 = vmul.f32 %v76, %v269
  %v337 = vmul.f32 %v77, %v269
  %v338 = vmul.f32 %v78, %v269
  %v339 = vmul.f32 %v79, %v269
  %v340 = vmul.f32 %v80, %v269
  %v341 = vmul.f32 %v81, %v269
  %v342 = vmul.f32 %v82, %v269
  %v343 = vmul.f32 %v83, %v269
  %v344 = vmul.f32 %v84, %v269
  %v345 = vmul.f32 %v85, %v269
  %v346 = vmul.f32 %v86, %v269
  %v347 = vmul.f32 %v87, %v269
  %v348 = vmul.f32 %v88, %v269
  %v349 = vmul.f32 %v89, %v269
  %v350 = vmul.f32 %v90, %v269
  %v351 = vmul.f32 %v91, %v269
  %v352 = vmul.f32 %v92, %v269
  %v353 = vmul.f32 %v93, %v269
  %v354 = vmul.f32 %v94, %v269
  %v355 = vmul.f32 %v95, %v269
  %v356 = vmul.f32 %v96, %v269
  %v357 = vmul.f32 %v97, %v269
  %v358 = vmul.f32 %v98, %v269
  %v359 = vmul.f32 %v99, %v269
  %v360 = vmul.f32 %v100, %v269
  %v361 = vmul.f32 %v101, %v269
  %v362 = vmul.f32 %v102, %v269
  %v363 = vmul.f32 %v103, %v269
  %v364 = vmul.f32 %v104, %v269
  %v365 = vmul.f32 %v105, %v269
  %v366 = vmul.f32 %v106, %v269
  %v367 = vmul.f32 %v107, %v269
  %v368 = vmul.f32 %v108, %v269
  %v369 = vmul.f32 %v109, %v269
  %v370 = vmul.f32 %v110, %v269
  %v371 = vmul.f32 %v111, %v269
  %v372 = vmul.f32 %v112, %v269
  %v373 = vmul.f32 %v113, %v269
  %v374 = vmul.f32 %v114, %v269
  %v375 = vmul.f32 %v115, %v269
  %v376 = vmul.f32 %v116, %v269
  %v377 = vmul.f32 %v117, %v269
  %v378 = vmul.f32 %v118, %v269
  %v379 = vmul.f32 %v119, %v269
  %v380 = vmul.f32 %v120, %v269
  %v381 = vmul.f32 %v121, %v269
  %v382 = vmul.f32 %v122, %v269
  %v383 = vmul.f32 %v123, %v269
  %v384 = vmul.f32 %v124, %v269
  %v385 = vmul.f32 %v125, %v269
  %v386 = vmul.f32 %v126, %v269
  %v387 = vmul.f32 %v127, %v269
  %v388 = vmul.f32 %v128, %v269
  %v389 = vmul.f32 %v129, %v269
  %v390 = vmul.f32 %v130, %v269
  %v391 = vmul.f32 %v131, %v269
  %v392 = vmul.f32 %v132, %v269
  %v393 = vmul.f32 %v133, %v269
  %v394 = vmul.f32 %v134, %v269
  %v395 = vmul.f32 %v135, %v269
  %v396 = vmul.f32 %v136, %v269
  %v397 = vmul.f32 %v137, %v269
  %v398 = vmul.f32 %v138, %v269
  %v399 = vmul.f32 %v139, %v269
  %v400 = vmul.f32 %v140, %v269
  %v401 = vmul.f32 %v141, %v269
  %v402 = vmul.f32 %v142, %v269
  %v403 = vmul.f32 %v143, %v269
  %v404 = vmul.f32 %v144, %v269
  %v405 = vmul.f32 %v145, %v269
  %v406 = vmul.f32 %v146, %v269
  %v407 = vmul.f32 %v147, %v269
  %v408 = vmul.f32 %v148, %v269
  %v409 = vmul.f32 %v149, %v269
  %v410 = vmul.f32 %v150, %v269
  %v411 = vmul.f32 %v151, %v269
  %v412 = vmul.f32 %v152, %v269
  %v413 = vmul.f32 %v153, %v269
  %v414 = vmul.f32 %v154, %v269
  %v415 = vmul.f32 %v155, %v269
  %v416 = vmul.f32 %v156, %v269
  %v417 = vmul.f32 %v157, %v269
  %v418 = vmul.f32 %v158, %v269
  %v419 = vmul.f32 %v159, %v269
  %v420 = vmul.f32 %v160, %v269
  %v421 = vmul.f32 %v161, %v269
  %v422 = vmul.f32 %v162, %v269
  %v423 = vmul.f32 %v163, %v269
  %v424 = vmul.f32 %v164, %v269
  %v425 = vmul.f32 %v165, %v269
  %v426 = vmul.f32 %v166, %v269
  %v427 = vmul.f32 %v167, %v269
  %v428 = vmul.f32 %v168, %v269
  %v429 = vmul.f32 %v169, %v269
  %v430 = vmul.f32 %v170, %v269
  %v431 = vmul.f32 %v171, %v269
  %v432 = vmul.f32 %v172, %v269
  %v433 = vmul.f32 %v173, %v269
  %v434 = vmul.f32 %v174, %v269
  %v435 = vmul.f32 %v175, %v269
  %v436 = vmul.f32 %v176, %v269
  %v437 = vmul.f32 %v177, %v269
  %v438 = vmul.f32 %v178, %v269
  %v439 = vmul.f32 %v179, %v269
  %v440 = vmul.f32 %v180, %v269
  %v441 = vmul.f32 %v181, %v269
  %v442 = vmul.f32 %v182, %v269
  %v443 = vmul.f32 %v183, %v269
  %v444 = vmul.f32 %v184, %v269
  %v445 = vmul.f32 %v185, %v269
  %v446 = vmul.f32 %v186, %v269
  %v447 = vmul.f32 %v187, %v269
  %v448 = vmul.f32 %v188, %v269
  %v449 = vmul.f32 %v189, %v269
  %v450 = vmul.f32 %v190, %v269
  %v451 = vmul.f32 %v191, %v269
  %v452 = vmul.f32 %v192, %v269
  %v453 = vmul.f32 %v193, %v269
  %v454 = vmul.f32 %v194, %v269
  %v455 = vmul.f32 %v195, %v269
  %v456 = vmul.f32 %v196, %v269
  %v457 = vmul.f32 %v197, %v269
  %v458 = vmul.f32 %v198, %v269
  %v459 = vmul.f32 %v199, %v269
  %v460 = vmul.f32 %v200, %v269
  %v461 = vmul.f32 %v201, %v269
  %v462 = vmul.f32 %v202, %v269
  %v463 = vmul.f32 %v203, %v269
  %v464 = vmul.f32 %v204, %v269
  %v465 = vmul.f32 %v205, %v269
  %v466 = vmul.f32 %v206, %v269
  %v467 = vmul.f32 %v207, %v269
  %v468 = vmul.f32 %v208, %v269
  %v469 = vmul.f32 %v209, %v269
  %v470 = vmul.f32 %v210, %v269
  %v471 = vmul.f32 %v211, %v269
  %v472 = vmul.f32 %v212, %v269
  %v473 = vmul.f32 %v213, %v269
  %v474 = vmul.f32 %v214, %v269
  %v475 = vmul.f32 %v215, %v269
  %v476 = vmul.f32 %v216, %v269
  %v477 = vmul.f32 %v217, %v269
  %v478 = vmul.f32 %v218, %v269
  %v479 = vmul.f32 %v219, %v269
  %v480 = vmul.f32 %v220, %v269
  %v481 = vmul.f32 %v221, %v269
  %v482 = vmul.f32 %v222, %v269
  %v483 = vmul.f32 %v223, %v269
  %v484 = vmul.f32 %v224, %v269
  %v485 = vmul.f32 %v225, %v269
  %v486 = vmul.f32 %v226, %v269
  %v487 = vmul.f32 %v227, %v269
  %v488 = vmul.f32 %v228, %v269
  %v489 = vmul.f32 %v229, %v269
  %v490 = vmul.f32 %v230, %v269
  %v491 = vmul.f32 %v231, %v269
  %v492 = vmul.f32 %v232, %v269
  %v493 = vmul.f32 %v233, %v269
  %v494 = vmul.f32 %v234, %v269
  %v495 = vmul.f32 %v235, %v269
  %v496 = vmul.f32 %v236, %v269
  %v497 = vmul.f32 %v237, %v269
  %v498 = vmul.f32 %v238, %v269
  %v499 = vmul.f32 %v239, %v269
  %v500 = vmul.f32 %v240, %v269
  %v501 = vmul.f32 %v241, %v269
  %v502 = vmul.f32 %v242, %v269
  %v503 = vmul.f32 %v243, %v269
  %v504 = vmul.f32 %v244, %v269
  %v505 = vmul.f32 %v245, %v269
  %v506 = vmul.f32 %v246, %v269
  %v507 = vmul.f32 %v247, %v269
  %v508 = vmul.f32 %v248, %v269
  %v509 = vmul.f32 %v249, %v269
  %v510 = vmul.f32 %v250, %v269
  %v511 = vmul.f32 %v251, %v269
  %v512 = vmul.f32 %v252, %v269
  %v513 = vmul.f32 %v253, %v269
  %v514 = vmul.f32 %v254, %v269
  %v515 = vmul.f32 %v255, %v269
  %v516 = vmul.f32 %v256, %v269
  %v517 = vmul.f32 %v257, %v269
  %v518 = vmul.f32 %v258, %v269
  %v519 = vmul.f32 %v259, %v269
  %v520 = vmul.f32 %v260, %v269
  %v521 = vmul.f32 %v261, %v269
  %v522 = vmul.f32 %v262, %v269
  %v523 = vmul.f32 %v263, %v269
  %v524 = vmul.f32 %v264, %v269
  %v525 = vmul.f32 %v265, %v269
  %v526 = vmul.f32 %v266, %v269
  %vm527 = vcmask 97280
  %v528 = vsel %vm527, %v271, 0.0
  %529 = vadd.xlane.f32.xlu0 %v528
  %v530 = vpop.xlane.xlu0 %529
  %v531 = vsel %vm527, %v272, 0.0
  %532 = vadd.xlane.f32.xlu0 %v531
  %v533 = vpop.xlane.xlu0 %532
  %v534 = vsel %vm527, %v273, 0.0
  %535 = vadd.xlane.f32.xlu0 %v534
  %v536 = vpop.xlane.xlu0 %535
  %v537 = vsel %vm527, %v274, 0.0
  %538 = vadd.xlane.f32.xlu0 %v537
  %v539 = vpop.xlane.xlu0 %538
  %v540 = vsel %vm527, %v275, 0.0
  %541 = vadd.xlane.f32.xlu0 %v540
  %v542 = vpop.xlane.xlu0 %541
  %v543 = vsel %vm527, %v276, 0.0
  %544 = vadd.xlane.f32.xlu0 %v543
  %v545 = vpop.xlane.xlu0 %544
  %v546 = vsel %vm527, %v277, 0.0
  %547 = vadd.xlane.f32.xlu0 %v546
  %v548 = vpop.xlane.xlu0 %547
  %v549 = vsel %vm527, %v278, 0.0
  %550 = vadd.xlane.f32.xlu0 %v549
  %v551 = vpop.xlane.xlu0 %550
  %v552 = vsel %vm527, %v279, 0.0
  %553 = vadd.xlane.f32.xlu0 %v552
  %v554 = vpop.xlane.xlu0 %553
  %v555 = vsel %vm527, %v280, 0.0
  %556 = vadd.xlane.f32.xlu0 %v555
  %v557 = vpop.xlane.xlu0 %556
  %v558 = vsel %vm527, %v281, 0.0
  %559 = vadd.xlane.f32.xlu0 %v558
  %v560 = vpop.xlane.xlu0 %559
  %v561 = vsel %vm527, %v282, 0.0
  %562 = vadd.xlane.f32.xlu0 %v561
  %v563 = vpop.xlane.xlu0 %562
  %v564 = vsel %vm527, %v283, 0.0
  %565 = vadd.xlane.f32.xlu0 %v564
  %v566 = vpop.xlane.xlu0 %565
  %v567 = vsel %vm527, %v284, 0.0
  %568 = vadd.xlane.f32.xlu0 %v567
  %v569 = vpop.xlane.xlu0 %568
  %v570 = vsel %vm527, %v285, 0.0
  %571 = vadd.xlane.f32.xlu0 %v570
  %v572 = vpop.xlane.xlu0 %571
  %v573 = vsel %vm527, %v286, 0.0
  %574 = vadd.xlane.f32.xlu0 %v573
  %v575 = vpop.xlane.xlu0 %574
  %v576 = vsel %vm527, %v287, 0.0
  %577 = vadd.xlane.f32.xlu0 %v576
  %v578 = vpop.xlane.xlu0 %577
  %v579 = vsel %vm527, %v288, 0.0
  %580 = vadd.xlane.f32.xlu0 %v579
  %v581 = vpop.xlane.xlu0 %580
  %v582 = vsel %vm527, %v289, 0.0
  %583 = vadd.xlane.f32.xlu0 %v582
  %v584 = vpop.xlane.xlu0 %583
  %v585 = vsel %vm527, %v290, 0.0
  %586 = vadd.xlane.f32.xlu0 %v585
  %v587 = vpop.xlane.xlu0 %586
  %v588 = vsel %vm527, %v291, 0.0
  %589 = vadd.xlane.f32.xlu0 %v588
  %v590 = vpop.xlane.xlu0 %589
  %v591 = vsel %vm527, %v292, 0.0
  %592 = vadd.xlane.f32.xlu0 %v591
  %v593 = vpop.xlane.xlu0 %592
  %v594 = vsel %vm527, %v293, 0.0
  %595 = vadd.xlane.f32.xlu0 %v594
  %v596 = vpop.xlane.xlu0 %595
  %v597 = vsel %vm527, %v294, 0.0
  %598 = vadd.xlane.f32.xlu0 %v597
  %v599 = vpop.xlane.xlu0 %598
  %v600 = vsel %vm527, %v295, 0.0
  %601 = vadd.xlane.f32.xlu0 %v600
  %v602 = vpop.xlane.xlu0 %601
  %v603 = vsel %vm527, %v296, 0.0
  %604 = vadd.xlane.f32.xlu0 %v603
  %v605 = vpop.xlane.xlu0 %604
  %v606 = vsel %vm527, %v297, 0.0
  %607 = vadd.xlane.f32.xlu0 %v606
  %v608 = vpop.xlane.xlu0 %607
  %v609 = vsel %vm527, %v298, 0.0
  %610 = vadd.xlane.f32.xlu0 %v609
  %v611 = vpop.xlane.xlu0 %610
  %v612 = vsel %vm527, %v299, 0.0
  %613 = vadd.xlane.f32.xlu0 %v612
  %v614 = vpop.xlane.xlu0 %613
  %v615 = vsel %vm527, %v300, 0.0
  %616 = vadd.xlane.f32.xlu0 %v615
  %v617 = vpop.xlane.xlu0 %616
  %v618 = vsel %vm527, %v301, 0.0
  %619 = vadd.xlane.f32.xlu0 %v618
  %v620 = vpop.xlane.xlu0 %619
  %v621 = vsel %vm527, %v302, 0.0
  %622 = vadd.xlane.f32.xlu0 %v621
  %v623 = vpop.xlane.xlu0 %622
  %v624 = vsel %vm527, %v303, 0.0
  %625 = vadd.xlane.f32.xlu0 %v624
  %v626 = vpop.xlane.xlu0 %625
  %v627 = vsel %vm527, %v304, 0.0
  %628 = vadd.xlane.f32.xlu0 %v627
  %v629 = vpop.xlane.xlu0 %628
  %v630 = vsel %vm527, %v305, 0.0
  %631 = vadd.xlane.f32.xlu0 %v630
  %v632 = vpop.xlane.xlu0 %631
  %v633 = vsel %vm527, %v306, 0.0
  %634 = vadd.xlane.f32.xlu0 %v633
  %v635 = vpop.xlane.xlu0 %634
  %v636 = vsel %vm527, %v307, 0.0
  %637 = vadd.xlane.f32.xlu0 %v636
  %v638 = vpop.xlane.xlu0 %637
  %v639 = vsel %vm527, %v308, 0.0
  %640 = vadd.xlane.f32.xlu0 %v639
  %v641 = vpop.xlane.xlu0 %640
  %v642 = vsel %vm527, %v309, 0.0
  %643 = vadd.xlane.f32.xlu0 %v642
  %v644 = vpop.xlane.xlu0 %643
  %v645 = vsel %vm527, %v310, 0.0
  %646 = vadd.xlane.f32.xlu0 %v645
  %v647 = vpop.xlane.xlu0 %646
  %v648 = vsel %vm527, %v311, 0.0
  %649 = vadd.xlane.f32.xlu0 %v648
  %v650 = vpop.xlane.xlu0 %649
  %v651 = vsel %vm527, %v312, 0.0
  %652 = vadd.xlane.f32.xlu0 %v651
  %v653 = vpop.xlane.xlu0 %652
  %v654 = vsel %vm527, %v313, 0.0
  %655 = vadd.xlane.f32.xlu0 %v654
  %v656 = vpop.xlane.xlu0 %655
  %v657 = vsel %vm527, %v314, 0.0
  %658 = vadd.xlane.f32.xlu0 %v657
  %v659 = vpop.xlane.xlu0 %658
  %v660 = vsel %vm527, %v315, 0.0
  %661 = vadd.xlane.f32.xlu0 %v660
  %v662 = vpop.xlane.xlu0 %661
  %v663 = vsel %vm527, %v316, 0.0
  %664 = vadd.xlane.f32.xlu0 %v663
  %v665 = vpop.xlane.xlu0 %664
  %v666 = vsel %vm527, %v317, 0.0
  %667 = vadd.xlane.f32.xlu0 %v666
  %v668 = vpop.xlane.xlu0 %667
  %v669 = vsel %vm527, %v318, 0.0
  %670 = vadd.xlane.f32.xlu0 %v669
  %v671 = vpop.xlane.xlu0 %670
  %v672 = vsel %vm527, %v319, 0.0
  %673 = vadd.xlane.f32.xlu0 %v672
  %v674 = vpop.xlane.xlu0 %673
  %v675 = vsel %vm527, %v320, 0.0
  %676 = vadd.xlane.f32.xlu0 %v675
  %v677 = vpop.xlane.xlu0 %676
  %v678 = vsel %vm527, %v321, 0.0
  %679 = vadd.xlane.f32.xlu0 %v678
  %v680 = vpop.xlane.xlu0 %679
  %v681 = vsel %vm527, %v322, 0.0
  %682 = vadd.xlane.f32.xlu0 %v681
  %v683 = vpop.xlane.xlu0 %682
  %v684 = vsel %vm527, %v323, 0.0
  %685 = vadd.xlane.f32.xlu0 %v684
  %v686 = vpop.xlane.xlu0 %685
  %v687 = vsel %vm527, %v324, 0.0
  %688 = vadd.xlane.f32.xlu0 %v687
  %v689 = vpop.xlane.xlu0 %688
  %v690 = vsel %vm527, %v325, 0.0
  %691 = vadd.xlane.f32.xlu0 %v690
  %v692 = vpop.xlane.xlu0 %691
  %v693 = vsel %vm527, %v326, 0.0
  %694 = vadd.xlane.f32.xlu0 %v693
  %v695 = vpop.xlane.xlu0 %694
  %v696 = vsel %vm527, %v327, 0.0
  %697 = vadd.xlane.f32.xlu0 %v696
  %v698 = vpop.xlane.xlu0 %697
  %v699 = vsel %vm527, %v328, 0.0
  %700 = vadd.xlane.f32.xlu0 %v699
  %v701 = vpop.xlane.xlu0 %700
  %v702 = vsel %vm527, %v329, 0.0
  %703 = vadd.xlane.f32.xlu0 %v702
  %v704 = vpop.xlane.xlu0 %703
  %v705 = vsel %vm527, %v330, 0.0
  %706 = vadd.xlane.f32.xlu0 %v705
  %v707 = vpop.xlane.xlu0 %706
  %v708 = vsel %vm527, %v331, 0.0
  %709 = vadd.xlane.f32.xlu0 %v708
  %v710 = vpop.xlane.xlu0 %709
  %v711 = vsel %vm527, %v332, 0.0
  %712 = vadd.xlane.f32.xlu0 %v711
  %v713 = vpop.xlane.xlu0 %712
  %v714 = vsel %vm527, %v333, 0.0
  %715 = vadd.xlane.f32.xlu0 %v714
  %v716 = vpop.xlane.xlu0 %715
  %v717 = vsel %vm527, %v334, 0.0
  %718 = vadd.xlane.f32.xlu0 %v717
  %v719 = vpop.xlane.xlu0 %718
  %v720 = vsel %vm527, %v335, 0.0
  %721 = vadd.xlane.f32.xlu0 %v720
  %v722 = vpop.xlane.xlu0 %721
  %v723 = vsel %vm527, %v336, 0.0
  %724 = vadd.xlane.f32.xlu0 %v723
  %v725 = vpop.xlane.xlu0 %724
  %v726 = vsel %vm527, %v337, 0.0
  %727 = vadd.xlane.f32.xlu0 %v726
  %v728 = vpop.xlane.xlu0 %727
  %v729 = vsel %vm527, %v338, 0.0
  %730 = vadd.xlane.f32.xlu0 %v729
  %v731 = vpop.xlane.xlu0 %730
  %v732 = vsel %vm527, %v339, 0.0
  %733 = vadd.xlane.f32.xlu0 %v732
  %v734 = vpop.xlane.xlu0 %733
  %v735 = vsel %vm527, %v340, 0.0
  %736 = vadd.xlane.f32.xlu0 %v735
  %v737 = vpop.xlane.xlu0 %736
  %v738 = vsel %vm527, %v341, 0.0
  %739 = vadd.xlane.f32.xlu0 %v738
  %v740 = vpop.xlane.xlu0 %739
  %v741 = vsel %vm527, %v342, 0.0
  %742 = vadd.xlane.f32.xlu0 %v741
  %v743 = vpop.xlane.xlu0 %742
  %v744 = vsel %vm527, %v343, 0.0
  %745 = vadd.xlane.f32.xlu0 %v744
  %v746 = vpop.xlane.xlu0 %745
  %v747 = vsel %vm527, %v344, 0.0
  %748 = vadd.xlane.f32.xlu0 %v747
  %v749 = vpop.xlane.xlu0 %748
  %v750 = vsel %vm527, %v345, 0.0
  %751 = vadd.xlane.f32.xlu0 %v750
  %v752 = vpop.xlane.xlu0 %751
  %v753 = vsel %vm527, %v346, 0.0
  %754 = vadd.xlane.f32.xlu0 %v753
  %v755 = vpop.xlane.xlu0 %754
  %v756 = vsel %vm527, %v347, 0.0
  %757 = vadd.xlane.f32.xlu0 %v756
  %v758 = vpop.xlane.xlu0 %757
  %v759 = vsel %vm527, %v348, 0.0
  %760 = vadd.xlane.f32.xlu0 %v759
  %v761 = vpop.xlane.xlu0 %760
  %v762 = vsel %vm527, %v349, 0.0
  %763 = vadd.xlane.f32.xlu0 %v762
  %v764 = vpop.xlane.xlu0 %763
  %v765 = vsel %vm527, %v350, 0.0
  %766 = vadd.xlane.f32.xlu0 %v765
  %v767 = vpop.xlane.xlu0 %766
  %v768 = vsel %vm527, %v351, 0.0
  %769 = vadd.xlane.f32.xlu0 %v768
  %v770 = vpop.xlane.xlu0 %769
  %v771 = vsel %vm527, %v352, 0.0
  %772 = vadd.xlane.f32.xlu0 %v771
  %v773 = vpop.xlane.xlu0 %772
  %v774 = vsel %vm527, %v353, 0.0
  %775 = vadd.xlane.f32.xlu0 %v774
  %v776 = vpop.xlane.xlu0 %775
  %v777 = vsel %vm527, %v354, 0.0
  %778 = vadd.xlane.f32.xlu0 %v777
  %v779 = vpop.xlane.xlu0 %778
  %v780 = vsel %vm527, %v355, 0.0
  %781 = vadd.xlane.f32.xlu0 %v780
  %v782 = vpop.xlane.xlu0 %781
  %v783 = vsel %vm527, %v356, 0.0
  %784 = vadd.xlane.f32.xlu0 %v783
  %v785 = vpop.xlane.xlu0 %784
  %v786 = vsel %vm527, %v357, 0.0
  %787 = vadd.xlane.f32.xlu0 %v786
  %v788 = vpop.xlane.xlu0 %787
  %v789 = vsel %vm527, %v358, 0.0
  %790 = vadd.xlane.f32.xlu0 %v789
  %v791 = vpop.xlane.xlu0 %790
  %v792 = vsel %vm527, %v359, 0.0
  %793 = vadd.xlane.f32.xlu0 %v792
  %v794 = vpop.xlane.xlu0 %793
  %v795 = vsel %vm527, %v360, 0.0
  %796 = vadd.xlane.f32.xlu0 %v795
  %v797 = vpop.xlane.xlu0 %796
  %v798 = vsel %vm527, %v361, 0.0
  %799 = vadd.xlane.f32.xlu0 %v798
  %v800 = vpop.xlane.xlu0 %799
  %v801 = vsel %vm527, %v362, 0.0
  %802 = vadd.xlane.f32.xlu0 %v801
  %v803 = vpop.xlane.xlu0 %802
  %v804 = vsel %vm527, %v363, 0.0
  %805 = vadd.xlane.f32.xlu0 %v804
  %v806 = vpop.xlane.xlu0 %805
  %v807 = vsel %vm527, %v364, 0.0
  %808 = vadd.xlane.f32.xlu0 %v807
  %v809 = vpop.xlane.xlu0 %808
  %v810 = vsel %vm527, %v365, 0.0
  %811 = vadd.xlane.f32.xlu0 %v810
  %v812 = vpop.xlane.xlu0 %811
  %v813 = vsel %vm527, %v366, 0.0
  %814 = vadd.xlane.f32.xlu0 %v813
  %v815 = vpop.xlane.xlu0 %814
  %v816 = vsel %vm527, %v367, 0.0
  %817 = vadd.xlane.f32.xlu0 %v816
  %v818 = vpop.xlane.xlu0 %817
  %v819 = vsel %vm527, %v368, 0.0
  %820 = vadd.xlane.f32.xlu0 %v819
  %v821 = vpop.xlane.xlu0 %820
  %v822 = vsel %vm527, %v369, 0.0
  %823 = vadd.xlane.f32.xlu0 %v822
  %v824 = vpop.xlane.xlu0 %823
  %v825 = vsel %vm527, %v370, 0.0
  %826 = vadd.xlane.f32.xlu0 %v825
  %v827 = vpop.xlane.xlu0 %826
  %v828 = vsel %vm527, %v371, 0.0
  %829 = vadd.xlane.f32.xlu0 %v828
  %v830 = vpop.xlane.xlu0 %829
  %v831 = vsel %vm527, %v372, 0.0
  %832 = vadd.xlane.f32.xlu0 %v831
  %v833 = vpop.xlane.xlu0 %832
  %v834 = vsel %vm527, %v373, 0.0
  %835 = vadd.xlane.f32.xlu0 %v834
  %v836 = vpop.xlane.xlu0 %835
  %v837 = vsel %vm527, %v374, 0.0
  %838 = vadd.xlane.f32.xlu0 %v837
  %v839 = vpop.xlane.xlu0 %838
  %v840 = vsel %vm527, %v375, 0.0
  %841 = vadd.xlane.f32.xlu0 %v840
  %v842 = vpop.xlane.xlu0 %841
  %v843 = vsel %vm527, %v376, 0.0
  %844 = vadd.xlane.f32.xlu0 %v843
  %v845 = vpop.xlane.xlu0 %844
  %v846 = vsel %vm527, %v377, 0.0
  %847 = vadd.xlane.f32.xlu0 %v846
  %v848 = vpop.xlane.xlu0 %847
  %v849 = vsel %vm527, %v378, 0.0
  %850 = vadd.xlane.f32.xlu0 %v849
  %v851 = vpop.xlane.xlu0 %850
  %v852 = vsel %vm527, %v379, 0.0
  %853 = vadd.xlane.f32.xlu0 %v852
  %v854 = vpop.xlane.xlu0 %853
  %v855 = vsel %vm527, %v380, 0.0
  %856 = vadd.xlane.f32.xlu0 %v855
  %v857 = vpop.xlane.xlu0 %856
  %v858 = vsel %vm527, %v381, 0.0
  %859 = vadd.xlane.f32.xlu0 %v858
  %v860 = vpop.xlane.xlu0 %859
  %v861 = vsel %vm527, %v382, 0.0
  %862 = vadd.xlane.f32.xlu0 %v861
  %v863 = vpop.xlane.xlu0 %862
  %v864 = vsel %vm527, %v383, 0.0
  %865 = vadd.xlane.f32.xlu0 %v864
  %v866 = vpop.xlane.xlu0 %865
  %v867 = vsel %vm527, %v384, 0.0
  %868 = vadd.xlane.f32.xlu0 %v867
  %v869 = vpop.xlane.xlu0 %868
  %v870 = vsel %vm527, %v385, 0.0
  %871 = vadd.xlane.f32.xlu0 %v870
  %v872 = vpop.xlane.xlu0 %871
  %v873 = vsel %vm527, %v386, 0.0
  %874 = vadd.xlane.f32.xlu0 %v873
  %v875 = vpop.xlane.xlu0 %874
  %v876 = vsel %vm527, %v387, 0.0
  %877 = vadd.xlane.f32.xlu0 %v876
  %v878 = vpop.xlane.xlu0 %877
  %v879 = vsel %vm527, %v388, 0.0
  %880 = vadd.xlane.f32.xlu0 %v879
  %v881 = vpop.xlane.xlu0 %880
  %v882 = vsel %vm527, %v389, 0.0
  %883 = vadd.xlane.f32.xlu0 %v882
  %v884 = vpop.xlane.xlu0 %883
  %v885 = vsel %vm527, %v390, 0.0
  %886 = vadd.xlane.f32.xlu0 %v885
  %v887 = vpop.xlane.xlu0 %886
  %v888 = vsel %vm527, %v391, 0.0
  %889 = vadd.xlane.f32.xlu0 %v888
  %v890 = vpop.xlane.xlu0 %889
  %v891 = vsel %vm527, %v392, 0.0
  %892 = vadd.xlane.f32.xlu0 %v891
  %v893 = vpop.xlane.xlu0 %892
  %v894 = vsel %vm527, %v393, 0.0
  %895 = vadd.xlane.f32.xlu0 %v894
  %v896 = vpop.xlane.xlu0 %895
  %v897 = vsel %vm527, %v394, 0.0
  %898 = vadd.xlane.f32.xlu0 %v897
  %v899 = vpop.xlane.xlu0 %898
  %v900 = vsel %vm527, %v395, 0.0
  %901 = vadd.xlane.f32.xlu0 %v900
  %v902 = vpop.xlane.xlu0 %901
  %v903 = vsel %vm527, %v396, 0.0
  %904 = vadd.xlane.f32.xlu0 %v903
  %v905 = vpop.xlane.xlu0 %904
  %v906 = vsel %vm527, %v397, 0.0
  %907 = vadd.xlane.f32.xlu0 %v906
  %v908 = vpop.xlane.xlu0 %907
  %v909 = vsel %vm527, %v398, 0.0
  %910 = vadd.xlane.f32.xlu0 %v909
  %v911 = vpop.xlane.xlu0 %910
  %v912 = vsel %vm527, %v399, 0.0
  %913 = vadd.xlane.f32.xlu0 %v912
  %v914 = vpop.xlane.xlu0 %913
  %v915 = vsel %vm527, %v400, 0.0
  %916 = vadd.xlane.f32.xlu0 %v915
  %v917 = vpop.xlane.xlu0 %916
  %v918 = vsel %vm527, %v401, 0.0
  %919 = vadd.xlane.f32.xlu0 %v918
  %v920 = vpop.xlane.xlu0 %919
  %v921 = vsel %vm527, %v402, 0.0
  %922 = vadd.xlane.f32.xlu0 %v921
  %v923 = vpop.xlane.xlu0 %922
  %v924 = vsel %vm527, %v403, 0.0
  %925 = vadd.xlane.f32.xlu0 %v924
  %v926 = vpop.xlane.xlu0 %925
  %v927 = vsel %vm527, %v404, 0.0
  %928 = vadd.xlane.f32.xlu0 %v927
  %v929 = vpop.xlane.xlu0 %928
  %v930 = vsel %vm527, %v405, 0.0
  %931 = vadd.xlane.f32.xlu0 %v930
  %v932 = vpop.xlane.xlu0 %931
  %v933 = vsel %vm527, %v406, 0.0
  %934 = vadd.xlane.f32.xlu0 %v933
  %v935 = vpop.xlane.xlu0 %934
  %v936 = vsel %vm527, %v407, 0.0
  %937 = vadd.xlane.f32.xlu0 %v936
  %v938 = vpop.xlane.xlu0 %937
  %v939 = vsel %vm527, %v408, 0.0
  %940 = vadd.xlane.f32.xlu0 %v939
  %v941 = vpop.xlane.xlu0 %940
  %v942 = vsel %vm527, %v409, 0.0
  %943 = vadd.xlane.f32.xlu0 %v942
  %v944 = vpop.xlane.xlu0 %943
  %v945 = vsel %vm527, %v410, 0.0
  %946 = vadd.xlane.f32.xlu0 %v945
  %v947 = vpop.xlane.xlu0 %946
  %v948 = vsel %vm527, %v411, 0.0
  %949 = vadd.xlane.f32.xlu0 %v948
  %v950 = vpop.xlane.xlu0 %949
  %v951 = vsel %vm527, %v412, 0.0
  %952 = vadd.xlane.f32.xlu0 %v951
  %v953 = vpop.xlane.xlu0 %952
  %v954 = vsel %vm527, %v413, 0.0
  %955 = vadd.xlane.f32.xlu0 %v954
  %v956 = vpop.xlane.xlu0 %955
  %v957 = vsel %vm527, %v414, 0.0
  %958 = vadd.xlane.f32.xlu0 %v957
  %v959 = vpop.xlane.xlu0 %958
  %v960 = vsel %vm527, %v415, 0.0
  %961 = vadd.xlane.f32.xlu0 %v960
  %v962 = vpop.xlane.xlu0 %961
  %v963 = vsel %vm527, %v416, 0.0
  %964 = vadd.xlane.f32.xlu0 %v963
  %v965 = vpop.xlane.xlu0 %964
  %v966 = vsel %vm527, %v417, 0.0
  %967 = vadd.xlane.f32.xlu0 %v966
  %v968 = vpop.xlane.xlu0 %967
  %v969 = vsel %vm527, %v418, 0.0
  %970 = vadd.xlane.f32.xlu0 %v969
  %v971 = vpop.xlane.xlu0 %970
  %v972 = vsel %vm527, %v419, 0.0
  %973 = vadd.xlane.f32.xlu0 %v972
  %v974 = vpop.xlane.xlu0 %973
  %v975 = vsel %vm527, %v420, 0.0
  %976 = vadd.xlane.f32.xlu0 %v975
  %v977 = vpop.xlane.xlu0 %976
  %v978 = vsel %vm527, %v421, 0.0
  %979 = vadd.xlane.f32.xlu0 %v978
  %v980 = vpop.xlane.xlu0 %979
  %v981 = vsel %vm527, %v422, 0.0
  %982 = vadd.xlane.f32.xlu0 %v981
  %v983 = vpop.xlane.xlu0 %982
  %v984 = vsel %vm527, %v423, 0.0
  %985 = vadd.xlane.f32.xlu0 %v984
  %v986 = vpop.xlane.xlu0 %985
  %v987 = vsel %vm527, %v424, 0.0
  %988 = vadd.xlane.f32.xlu0 %v987
  %v989 = vpop.xlane.xlu0 %988
  %v990 = vsel %vm527, %v425, 0.0
  %991 = vadd.xlane.f32.xlu0 %v990
  %v992 = vpop.xlane.xlu0 %991
  %v993 = vsel %vm527, %v426, 0.0
  %994 = vadd.xlane.f32.xlu0 %v993
  %v995 = vpop.xlane.xlu0 %994
  %v996 = vsel %vm527, %v427, 0.0
  %997 = vadd.xlane.f32.xlu0 %v996
  %v998 = vpop.xlane.xlu0 %997
  %v999 = vsel %vm527, %v428, 0.0
  %1000 = vadd.xlane.f32.xlu0 %v999
  %v1001 = vpop.xlane.xlu0 %1000
  %v1002 = vsel %vm527, %v429, 0.0
  %1003 = vadd.xlane.f32.xlu0 %v1002
  %v1004 = vpop.xlane.xlu0 %1003
  %v1005 = vsel %vm527, %v430, 0.0
  %1006 = vadd.xlane.f32.xlu0 %v1005
  %v1007 = vpop.xlane.xlu0 %1006
  %v1008 = vsel %vm527, %v431, 0.0
  %1009 = vadd.xlane.f32.xlu0 %v1008
  %v1010 = vpop.xlane.xlu0 %1009
  %v1011 = vsel %vm527, %v432, 0.0
  %1012 = vadd.xlane.f32.xlu0 %v1011
  %v1013 = vpop.xlane.xlu0 %1012
  %v1014 = vsel %vm527, %v433, 0.0
  %1015 = vadd.xlane.f32.xlu0 %v1014
  %v1016 = vpop.xlane.xlu0 %1015
  %v1017 = vsel %vm527, %v434, 0.0
  %1018 = vadd.xlane.f32.xlu0 %v1017
  %v1019 = vpop.xlane.xlu0 %1018
  %v1020 = vsel %vm527, %v435, 0.0
  %1021 = vadd.xlane.f32.xlu0 %v1020
  %v1022 = vpop.xlane.xlu0 %1021
  %v1023 = vsel %vm527, %v436, 0.0
  %1024 = vadd.xlane.f32.xlu0 %v1023
  %v1025 = vpop.xlane.xlu0 %1024
  %v1026 = vsel %vm527, %v437, 0.0
  %1027 = vadd.xlane.f32.xlu0 %v1026
  %v1028 = vpop.xlane.xlu0 %1027
  %v1029 = vsel %vm527, %v438, 0.0
  %1030 = vadd.xlane.f32.xlu0 %v1029
  %v1031 = vpop.xlane.xlu0 %1030
  %v1032 = vsel %vm527, %v439, 0.0
  %1033 = vadd.xlane.f32.xlu0 %v1032
  %v1034 = vpop.xlane.xlu0 %1033
  %v1035 = vsel %vm527, %v440, 0.0
  %1036 = vadd.xlane.f32.xlu0 %v1035
  %v1037 = vpop.xlane.xlu0 %1036
  %v1038 = vsel %vm527, %v441, 0.0
  %1039 = vadd.xlane.f32.xlu0 %v1038
  %v1040 = vpop.xlane.xlu0 %1039
  %v1041 = vsel %vm527, %v442, 0.0
  %1042 = vadd.xlane.f32.xlu0 %v1041
  %v1043 = vpop.xlane.xlu0 %1042
  %v1044 = vsel %vm527, %v443, 0.0
  %1045 = vadd.xlane.f32.xlu0 %v1044
  %v1046 = vpop.xlane.xlu0 %1045
  %v1047 = vsel %vm527, %v444, 0.0
  %1048 = vadd.xlane.f32.xlu0 %v1047
  %v1049 = vpop.xlane.xlu0 %1048
  %v1050 = vsel %vm527, %v445, 0.0
  %1051 = vadd.xlane.f32.xlu0 %v1050
  %v1052 = vpop.xlane.xlu0 %1051
  %v1053 = vsel %vm527, %v446, 0.0
  %1054 = vadd.xlane.f32.xlu0 %v1053
  %v1055 = vpop.xlane.xlu0 %1054
  %v1056 = vsel %vm527, %v447, 0.0
  %1057 = vadd.xlane.f32.xlu0 %v1056
  %v1058 = vpop.xlane.xlu0 %1057
  %v1059 = vsel %vm527, %v448, 0.0
  %1060 = vadd.xlane.f32.xlu0 %v1059
  %v1061 = vpop.xlane.xlu0 %1060
  %v1062 = vsel %vm527, %v449, 0.0
  %1063 = vadd.xlane.f32.xlu0 %v1062
  %v1064 = vpop.xlane.xlu0 %1063
  %v1065 = vsel %vm527, %v450, 0.0
  %1066 = vadd.xlane.f32.xlu0 %v1065
  %v1067 = vpop.xlane.xlu0 %1066
  %v1068 = vsel %vm527, %v451, 0.0
  %1069 = vadd.xlane.f32.xlu0 %v1068
  %v1070 = vpop.xlane.xlu0 %1069
  %v1071 = vsel %vm527, %v452, 0.0
  %1072 = vadd.xlane.f32.xlu0 %v1071
  %v1073 = vpop.xlane.xlu0 %1072
  %v1074 = vsel %vm527, %v453, 0.0
  %1075 = vadd.xlane.f32.xlu0 %v1074
  %v1076 = vpop.xlane.xlu0 %1075
  %v1077 = vsel %vm527, %v454, 0.0
  %1078 = vadd.xlane.f32.xlu0 %v1077
  %v1079 = vpop.xlane.xlu0 %1078
  %v1080 = vsel %vm527, %v455, 0.0
  %1081 = vadd.xlane.f32.xlu0 %v1080
  %v1082 = vpop.xlane.xlu0 %1081
  %v1083 = vsel %vm527, %v456, 0.0
  %1084 = vadd.xlane.f32.xlu0 %v1083
  %v1085 = vpop.xlane.xlu0 %1084
  %v1086 = vsel %vm527, %v457, 0.0
  %1087 = vadd.xlane.f32.xlu0 %v1086
  %v1088 = vpop.xlane.xlu0 %1087
  %v1089 = vsel %vm527, %v458, 0.0
  %1090 = vadd.xlane.f32.xlu0 %v1089
  %v1091 = vpop.xlane.xlu0 %1090
  %v1092 = vsel %vm527, %v459, 0.0
  %1093 = vadd.xlane.f32.xlu0 %v1092
  %v1094 = vpop.xlane.xlu0 %1093
  %v1095 = vsel %vm527, %v460, 0.0
  %1096 = vadd.xlane.f32.xlu0 %v1095
  %v1097 = vpop.xlane.xlu0 %1096
  %v1098 = vsel %vm527, %v461, 0.0
  %1099 = vadd.xlane.f32.xlu0 %v1098
  %v1100 = vpop.xlane.xlu0 %1099
  %v1101 = vsel %vm527, %v462, 0.0
  %1102 = vadd.xlane.f32.xlu0 %v1101
  %v1103 = vpop.xlane.xlu0 %1102
  %v1104 = vsel %vm527, %v463, 0.0
  %1105 = vadd.xlane.f32.xlu0 %v1104
  %v1106 = vpop.xlane.xlu0 %1105
  %v1107 = vsel %vm527, %v464, 0.0
  %1108 = vadd.xlane.f32.xlu0 %v1107
  %v1109 = vpop.xlane.xlu0 %1108
  %v1110 = vsel %vm527, %v465, 0.0
  %1111 = vadd.xlane.f32.xlu0 %v1110
  %v1112 = vpop.xlane.xlu0 %1111
  %v1113 = vsel %vm527, %v466, 0.0
  %1114 = vadd.xlane.f32.xlu0 %v1113
  %v1115 = vpop.xlane.xlu0 %1114
  %v1116 = vsel %vm527, %v467, 0.0
  %1117 = vadd.xlane.f32.xlu0 %v1116
  %v1118 = vpop.xlane.xlu0 %1117
  %v1119 = vsel %vm527, %v468, 0.0
  %1120 = vadd.xlane.f32.xlu0 %v1119
  %v1121 = vpop.xlane.xlu0 %1120
  %v1122 = vsel %vm527, %v469, 0.0
  %1123 = vadd.xlane.f32.xlu0 %v1122
  %v1124 = vpop.xlane.xlu0 %1123
  %v1125 = vsel %vm527, %v470, 0.0
  %1126 = vadd.xlane.f32.xlu0 %v1125
  %v1127 = vpop.xlane.xlu0 %1126
  %v1128 = vsel %vm527, %v471, 0.0
  %1129 = vadd.xlane.f32.xlu0 %v1128
  %v1130 = vpop.xlane.xlu0 %1129
  %v1131 = vsel %vm527, %v472, 0.0
  %1132 = vadd.xlane.f32.xlu0 %v1131
  %v1133 = vpop.xlane.xlu0 %1132
  %v1134 = vsel %vm527, %v473, 0.0
  %1135 = vadd.xlane.f32.xlu0 %v1134
  %v1136 = vpop.xlane.xlu0 %1135
  %v1137 = vsel %vm527, %v474, 0.0
  %1138 = vadd.xlane.f32.xlu0 %v1137
  %v1139 = vpop.xlane.xlu0 %1138
  %v1140 = vsel %vm527, %v475, 0.0
  %1141 = vadd.xlane.f32.xlu0 %v1140
  %v1142 = vpop.xlane.xlu0 %1141
  %v1143 = vsel %vm527, %v476, 0.0
  %1144 = vadd.xlane.f32.xlu0 %v1143
  %v1145 = vpop.xlane.xlu0 %1144
  %v1146 = vsel %vm527, %v477, 0.0
  %1147 = vadd.xlane.f32.xlu0 %v1146
  %v1148 = vpop.xlane.xlu0 %1147
  %v1149 = vsel %vm527, %v478, 0.0
  %1150 = vadd.xlane.f32.xlu0 %v1149
  %v1151 = vpop.xlane.xlu0 %1150
  %v1152 = vsel %vm527, %v479, 0.0
  %1153 = vadd.xlane.f32.xlu0 %v1152
  %v1154 = vpop.xlane.xlu0 %1153
  %v1155 = vsel %vm527, %v480, 0.0
  %1156 = vadd.xlane.f32.xlu0 %v1155
  %v1157 = vpop.xlane.xlu0 %1156
  %v1158 = vsel %vm527, %v481, 0.0
  %1159 = vadd.xlane.f32.xlu0 %v1158
  %v1160 = vpop.xlane.xlu0 %1159
  %v1161 = vsel %vm527, %v482, 0.0
  %1162 = vadd.xlane.f32.xlu0 %v1161
  %v1163 = vpop.xlane.xlu0 %1162
  %v1164 = vsel %vm527, %v483, 0.0
  %1165 = vadd.xlane.f32.xlu0 %v1164
  %v1166 = vpop.xlane.xlu0 %1165
  %v1167 = vsel %vm527, %v484, 0.0
  %1168 = vadd.xlane.f32.xlu0 %v1167
  %v1169 = vpop.xlane.xlu0 %1168
  %v1170 = vsel %vm527, %v485, 0.0
  %1171 = vadd.xlane.f32.xlu0 %v1170
  %v1172 = vpop.xlane.xlu0 %1171
  %v1173 = vsel %vm527, %v486, 0.0
  %1174 = vadd.xlane.f32.xlu0 %v1173
  %v1175 = vpop.xlane.xlu0 %1174
  %v1176 = vsel %vm527, %v487, 0.0
  %1177 = vadd.xlane.f32.xlu0 %v1176
  %v1178 = vpop.xlane.xlu0 %1177
  %v1179 = vsel %vm527, %v488, 0.0
  %1180 = vadd.xlane.f32.xlu0 %v1179
  %v1181 = vpop.xlane.xlu0 %1180
  %v1182 = vsel %vm527, %v489, 0.0
  %1183 = vadd.xlane.f32.xlu0 %v1182
  %v1184 = vpop.xlane.xlu0 %1183
  %v1185 = vsel %vm527, %v490, 0.0
  %1186 = vadd.xlane.f32.xlu0 %v1185
  %v1187 = vpop.xlane.xlu0 %1186
  %v1188 = vsel %vm527, %v491, 0.0
  %1189 = vadd.xlane.f32.xlu0 %v1188
  %v1190 = vpop.xlane.xlu0 %1189
  %v1191 = vsel %vm527, %v492, 0.0
  %1192 = vadd.xlane.f32.xlu0 %v1191
  %v1193 = vpop.xlane.xlu0 %1192
  %v1194 = vsel %vm527, %v493, 0.0
  %1195 = vadd.xlane.f32.xlu0 %v1194
  %v1196 = vpop.xlane.xlu0 %1195
  %v1197 = vsel %vm527, %v494, 0.0
  %1198 = vadd.xlane.f32.xlu0 %v1197
  %v1199 = vpop.xlane.xlu0 %1198
  %v1200 = vsel %vm527, %v495, 0.0
  %1201 = vadd.xlane.f32.xlu0 %v1200
  %v1202 = vpop.xlane.xlu0 %1201
  %v1203 = vsel %vm527, %v496, 0.0
  %1204 = vadd.xlane.f32.xlu0 %v1203
  %v1205 = vpop.xlane.xlu0 %1204
  %v1206 = vsel %vm527, %v497, 0.0
  %1207 = vadd.xlane.f32.xlu0 %v1206
  %v1208 = vpop.xlane.xlu0 %1207
  %v1209 = vsel %vm527, %v498, 0.0
  %1210 = vadd.xlane.f32.xlu0 %v1209
  %v1211 = vpop.xlane.xlu0 %1210
  %v1212 = vsel %vm527, %v499, 0.0
  %1213 = vadd.xlane.f32.xlu0 %v1212
  %v1214 = vpop.xlane.xlu0 %1213
  %v1215 = vsel %vm527, %v500, 0.0
  %1216 = vadd.xlane.f32.xlu0 %v1215
  %v1217 = vpop.xlane.xlu0 %1216
  %v1218 = vsel %vm527, %v501, 0.0
  %1219 = vadd.xlane.f32.xlu0 %v1218
  %v1220 = vpop.xlane.xlu0 %1219
  %v1221 = vsel %vm527, %v502, 0.0
  %1222 = vadd.xlane.f32.xlu0 %v1221
  %v1223 = vpop.xlane.xlu0 %1222
  %v1224 = vsel %vm527, %v503, 0.0
  %1225 = vadd.xlane.f32.xlu0 %v1224
  %v1226 = vpop.xlane.xlu0 %1225
  %v1227 = vsel %vm527, %v504, 0.0
  %1228 = vadd.xlane.f32.xlu0 %v1227
  %v1229 = vpop.xlane.xlu0 %1228
  %v1230 = vsel %vm527, %v505, 0.0
  %1231 = vadd.xlane.f32.xlu0 %v1230
  %v1232 = vpop.xlane.xlu0 %1231
  %v1233 = vsel %vm527, %v506, 0.0
  %1234 = vadd.xlane.f32.xlu0 %v1233
  %v1235 = vpop.xlane.xlu0 %1234
  %v1236 = vsel %vm527, %v507, 0.0
  %1237 = vadd.xlane.f32.xlu0 %v1236
  %v1238 = vpop.xlane.xlu0 %1237
  %v1239 = vsel %vm527, %v508, 0.0
  %1240 = vadd.xlane.f32.xlu0 %v1239
  %v1241 = vpop.xlane.xlu0 %1240
  %v1242 = vsel %vm527, %v509, 0.0
  %1243 = vadd.xlane.f32.xlu0 %v1242
  %v1244 = vpop.xlane.xlu0 %1243
  %v1245 = vsel %vm527, %v510, 0.0
  %1246 = vadd.xlane.f32.xlu0 %v1245
  %v1247 = vpop.xlane.xlu0 %1246
  %v1248 = vsel %vm527, %v511, 0.0
  %1249 = vadd.xlane.f32.xlu0 %v1248
  %v1250 = vpop.xlane.xlu0 %1249
  %v1251 = vsel %vm527, %v512, 0.0
  %1252 = vadd.xlane.f32.xlu0 %v1251
  %v1253 = vpop.xlane.xlu0 %1252
  %v1254 = vsel %vm527, %v513, 0.0
  %1255 = vadd.xlane.f32.xlu0 %v1254
  %v1256 = vpop.xlane.xlu0 %1255
  %v1257 = vsel %vm527, %v514, 0.0
  %1258 = vadd.xlane.f32.xlu0 %v1257
  %v1259 = vpop.xlane.xlu0 %1258
  %v1260 = vsel %vm527, %v515, 0.0
  %1261 = vadd.xlane.f32.xlu0 %v1260
  %v1262 = vpop.xlane.xlu0 %1261
  %v1263 = vsel %vm527, %v516, 0.0
  %1264 = vadd.xlane.f32.xlu0 %v1263
  %v1265 = vpop.xlane.xlu0 %1264
  %v1266 = vsel %vm527, %v517, 0.0
  %1267 = vadd.xlane.f32.xlu0 %v1266
  %v1268 = vpop.xlane.xlu0 %1267
  %v1269 = vsel %vm527, %v518, 0.0
  %1270 = vadd.xlane.f32.xlu0 %v1269
  %v1271 = vpop.xlane.xlu0 %1270
  %v1272 = vsel %vm527, %v519, 0.0
  %1273 = vadd.xlane.f32.xlu0 %v1272
  %v1274 = vpop.xlane.xlu0 %1273
  %v1275 = vsel %vm527, %v520, 0.0
  %1276 = vadd.xlane.f32.xlu0 %v1275
  %v1277 = vpop.xlane.xlu0 %1276
  %v1278 = vsel %vm527, %v521, 0.0
  %1279 = vadd.xlane.f32.xlu0 %v1278
  %v1280 = vpop.xlane.xlu0 %1279
  %v1281 = vsel %vm527, %v522, 0.0
  %1282 = vadd.xlane.f32.xlu0 %v1281
  %v1283 = vpop.xlane.xlu0 %1282
  %v1284 = vsel %vm527, %v523, 0.0
  %1285 = vadd.xlane.f32.xlu0 %v1284
  %v1286 = vpop.xlane.xlu0 %1285
  %v1287 = vsel %vm527, %v524, 0.0
  %1288 = vadd.xlane.f32.xlu0 %v1287
  %v1289 = vpop.xlane.xlu0 %1288
  %v1290 = vsel %vm527, %v525, 0.0
  %1291 = vadd.xlane.f32.xlu0 %v1290
  %v1292 = vpop.xlane.xlu0 %1291
  %v1293 = vsel %vm527, %v526, 0.0
  %1294 = vadd.xlane.f32.xlu0 %v1293
  %v1295 = vpop.xlane.xlu0 %1294
  %v1296 = vmul.f32 %v530, 1.442695
  %v1297 = vpow.pop %v1296
  %v1298 = vmul.f32 %v533, 1.442695
  %v1299 = vpow.pop %v1298
  %v1300 = vmul.f32 %v536, 1.442695
  %v1301 = vpow.pop %v1300
  %v1302 = vmul.f32 %v539, 1.442695
  %v1303 = vpow.pop %v1302
  %v1304 = vmul.f32 %v542, 1.442695
  %v1305 = vpow.pop %v1304
  %v1306 = vmul.f32 %v545, 1.442695
  %v1307 = vpow.pop %v1306
  %v1308 = vmul.f32 %v548, 1.442695
  %v1309 = vpow.pop %v1308
  %v1310 = vmul.f32 %v551, 1.442695
  %v1311 = vpow.pop %v1310
  %v1312 = vmul.f32 %v554, 1.442695
  %v1313 = vpow.pop %v1312
  %v1314 = vmul.f32 %v557, 1.442695
  %v1315 = vpow.pop %v1314
  %v1316 = vmul.f32 %v560, 1.442695
  %v1317 = vpow.pop %v1316
  %v1318 = vmul.f32 %v563, 1.442695
  %v1319 = vpow.pop %v1318
  %v1320 = vmul.f32 %v566, 1.442695
  %v1321 = vpow.pop %v1320
  %v1322 = vmul.f32 %v569, 1.442695
  %v1323 = vpow.pop %v1322
  %v1324 = vmul.f32 %v572, 1.442695
  %v1325 = vpow.pop %v1324
  %v1326 = vmul.f32 %v575, 1.442695
  %v1327 = vpow.pop %v1326
  %v1328 = vmul.f32 %v578, 1.442695
  %v1329 = vpow.pop %v1328
  %v1330 = vmul.f32 %v581, 1.442695
  %v1331 = vpow.pop %v1330
  %v1332 = vmul.f32 %v584, 1.442695
  %v1333 = vpow.pop %v1332
  %v1334 = vmul.f32 %v587, 1.442695
  %v1335 = vpow.pop %v1334
  %v1336 = vmul.f32 %v590, 1.442695
  %v1337 = vpow.pop %v1336
  %v1338 = vmul.f32 %v593, 1.442695
  %v1339 = vpow.pop %v1338
  %v1340 = vmul.f32 %v596, 1.442695
  %v1341 = vpow.pop %v1340
  %v1342 = vmul.f32 %v599, 1.442695
  %v1343 = vpow.pop %v1342
  %v1344 = vmul.f32 %v602, 1.442695
  %v1345 = vpow.pop %v1344
  %v1346 = vmul.f32 %v605, 1.442695
  %v1347 = vpow.pop %v1346
  %v1348 = vmul.f32 %v608, 1.442695
  %v1349 = vpow.pop %v1348
  %v1350 = vmul.f32 %v611, 1.442695
  %v1351 = vpow.pop %v1350
  %v1352 = vmul.f32 %v614, 1.442695
  %v1353 = vpow.pop %v1352
  %v1354 = vmul.f32 %v617, 1.442695
  %v1355 = vpow.pop %v1354
  %v1356 = vmul.f32 %v620, 1.442695
  %v1357 = vpow.pop %v1356
  %v1358 = vmul.f32 %v623, 1.442695
  %v1359 = vpow.pop %v1358
  %v1360 = vmul.f32 %v626, 1.442695
  %v1361 = vpow.pop %v1360
  %v1362 = vmul.f32 %v629, 1.442695
  %v1363 = vpow.pop %v1362
  %v1364 = vmul.f32 %v632, 1.442695
  %v1365 = vpow.pop %v1364
  %v1366 = vmul.f32 %v635, 1.442695
  %v1367 = vpow.pop %v1366
  %v1368 = vmul.f32 %v638, 1.442695
  %v1369 = vpow.pop %v1368
  %v1370 = vmul.f32 %v641, 1.442695
  %v1371 = vpow.pop %v1370
  %v1372 = vmul.f32 %v644, 1.442695
  %v1373 = vpow.pop %v1372
  %v1374 = vmul.f32 %v647, 1.442695
  %v1375 = vpow.pop %v1374
  %v1376 = vmul.f32 %v650, 1.442695
  %v1377 = vpow.pop %v1376
  %v1378 = vmul.f32 %v653, 1.442695
  %v1379 = vpow.pop %v1378
  %v1380 = vmul.f32 %v656, 1.442695
  %v1381 = vpow.pop %v1380
  %v1382 = vmul.f32 %v659, 1.442695
  %v1383 = vpow.pop %v1382
  %v1384 = vmul.f32 %v662, 1.442695
  %v1385 = vpow.pop %v1384
  %v1386 = vmul.f32 %v665, 1.442695
  %v1387 = vpow.pop %v1386
  %v1388 = vmul.f32 %v668, 1.442695
  %v1389 = vpow.pop %v1388
  %v1390 = vmul.f32 %v671, 1.442695
  %v1391 = vpow.pop %v1390
  %v1392 = vmul.f32 %v674, 1.442695
  %v1393 = vpow.pop %v1392
  %v1394 = vmul.f32 %v677, 1.442695
  %v1395 = vpow.pop %v1394
  %v1396 = vmul.f32 %v680, 1.442695
  %v1397 = vpow.pop %v1396
  %v1398 = vmul.f32 %v683, 1.442695
  %v1399 = vpow.pop %v1398
  %v1400 = vmul.f32 %v686, 1.442695
  %v1401 = vpow.pop %v1400
  %v1402 = vmul.f32 %v689, 1.442695
  %v1403 = vpow.pop %v1402
  %v1404 = vmul.f32 %v692, 1.442695
  %v1405 = vpow.pop %v1404
  %v1406 = vmul.f32 %v695, 1.442695
  %v1407 = vpow.pop %v1406
  %v1408 = vmul.f32 %v698, 1.442695
  %v1409 = vpow.pop %v1408
  %v1410 = vmul.f32 %v701, 1.442695
  %v1411 = vpow.pop %v1410
  %v1412 = vmul.f32 %v704, 1.442695
  %v1413 = vpow.pop %v1412
  %v1414 = vmul.f32 %v707, 1.442695
  %v1415 = vpow.pop %v1414
  %v1416 = vmul.f32 %v710, 1.442695
  %v1417 = vpow.pop %v1416
  %v1418 = vmul.f32 %v713, 1.442695
  %v1419 = vpow.pop %v1418
  %v1420 = vmul.f32 %v716, 1.442695
  %v1421 = vpow.pop %v1420
  %v1422 = vmul.f32 %v719, 1.442695
  %v1423 = vpow.pop %v1422
  %v1424 = vmul.f32 %v722, 1.442695
  %v1425 = vpow.pop %v1424
  %v1426 = vmul.f32 %v725, 1.442695
  %v1427 = vpow.pop %v1426
  %v1428 = vmul.f32 %v728, 1.442695
  %v1429 = vpow.pop %v1428
  %v1430 = vmul.f32 %v731, 1.442695
  %v1431 = vpow.pop %v1430
  %v1432 = vmul.f32 %v734, 1.442695
  %v1433 = vpow.pop %v1432
  %v1434 = vmul.f32 %v737, 1.442695
  %v1435 = vpow.pop %v1434
  %v1436 = vmul.f32 %v740, 1.442695
  %v1437 = vpow.pop %v1436
  %v1438 = vmul.f32 %v743, 1.442695
  %v1439 = vpow.pop %v1438
  %v1440 = vmul.f32 %v746, 1.442695
  %v1441 = vpow.pop %v1440
  %v1442 = vmul.f32 %v749, 1.442695
  %v1443 = vpow.pop %v1442
  %v1444 = vmul.f32 %v752, 1.442695
  %v1445 = vpow.pop %v1444
  %v1446 = vmul.f32 %v755, 1.442695
  %v1447 = vpow.pop %v1446
  %v1448 = vmul.f32 %v758, 1.442695
  %v1449 = vpow.pop %v1448
  %v1450 = vmul.f32 %v761, 1.442695
  %v1451 = vpow.pop %v1450
  %v1452 = vmul.f32 %v764, 1.442695
  %v1453 = vpow.pop %v1452
  %v1454 = vmul.f32 %v767, 1.442695
  %v1455 = vpow.pop %v1454
  %v1456 = vmul.f32 %v770, 1.442695
  %v1457 = vpow.pop %v1456
  %v1458 = vmul.f32 %v773, 1.442695
  %v1459 = vpow.pop %v1458
  %v1460 = vmul.f32 %v776, 1.442695
  %v1461 = vpow.pop %v1460
  %v1462 = vmul.f32 %v779, 1.442695
  %v1463 = vpow.pop %v1462
  %v1464 = vmul.f32 %v782, 1.442695
  %v1465 = vpow.pop %v1464
  %v1466 = vmul.f32 %v785, 1.442695
  %v1467 = vpow.pop %v1466
  %v1468 = vmul.f32 %v788, 1.442695
  %v1469 = vpow.pop %v1468
  %v1470 = vmul.f32 %v791, 1.442695
  %v1471 = vpow.pop %v1470
  %v1472 = vmul.f32 %v794, 1.442695
  %v1473 = vpow.pop %v1472
  %v1474 = vmul.f32 %v797, 1.442695
  %v1475 = vpow.pop %v1474
  %v1476 = vmul.f32 %v800, 1.442695
  %v1477 = vpow.pop %v1476
  %v1478 = vmul.f32 %v803, 1.442695
  %v1479 = vpow.pop %v1478
  %v1480 = vmul.f32 %v806, 1.442695
  %v1481 = vpow.pop %v1480
  %v1482 = vmul.f32 %v809, 1.442695
  %v1483 = vpow.pop %v1482
  %v1484 = vmul.f32 %v812, 1.442695
  %v1485 = vpow.pop %v1484
  %v1486 = vmul.f32 %v815, 1.442695
  %v1487 = vpow.pop %v1486
  %v1488 = vmul.f32 %v818, 1.442695
  %v1489 = vpow.pop %v1488
  %v1490 = vmul.f32 %v821, 1.442695
  %v1491 = vpow.pop %v1490
  %v1492 = vmul.f32 %v824, 1.442695
  %v1493 = vpow.pop %v1492
  %v1494 = vmul.f32 %v827, 1.442695
  %v1495 = vpow.pop %v1494
  %v1496 = vmul.f32 %v830, 1.442695
  %v1497 = vpow.pop %v1496
  %v1498 = vmul.f32 %v833, 1.442695
  %v1499 = vpow.pop %v1498
  %v1500 = vmul.f32 %v836, 1.442695
  %v1501 = vpow.pop %v1500
  %v1502 = vmul.f32 %v839, 1.442695
  %v1503 = vpow.pop %v1502
  %v1504 = vmul.f32 %v842, 1.442695
  %v1505 = vpow.pop %v1504
  %v1506 = vmul.f32 %v845, 1.442695
  %v1507 = vpow.pop %v1506
  %v1508 = vmul.f32 %v848, 1.442695
  %v1509 = vpow.pop %v1508
  %v1510 = vmul.f32 %v851, 1.442695
  %v1511 = vpow.pop %v1510
  %v1512 = vmul.f32 %v854, 1.442695
  %v1513 = vpow.pop %v1512
  %v1514 = vmul.f32 %v857, 1.442695
  %v1515 = vpow.pop %v1514
  %v1516 = vmul.f32 %v860, 1.442695
  %v1517 = vpow.pop %v1516
  %v1518 = vmul.f32 %v863, 1.442695
  %v1519 = vpow.pop %v1518
  %v1520 = vmul.f32 %v866, 1.442695
  %v1521 = vpow.pop %v1520
  %v1522 = vmul.f32 %v869, 1.442695
  %v1523 = vpow.pop %v1522
  %v1524 = vmul.f32 %v872, 1.442695
  %v1525 = vpow.pop %v1524
  %v1526 = vmul.f32 %v875, 1.442695
  %v1527 = vpow.pop %v1526
  %v1528 = vmul.f32 %v878, 1.442695
  %v1529 = vpow.pop %v1528
  %v1530 = vmul.f32 %v881, 1.442695
  %v1531 = vpow.pop %v1530
  %v1532 = vmul.f32 %v884, 1.442695
  %v1533 = vpow.pop %v1532
  %v1534 = vmul.f32 %v887, 1.442695
  %v1535 = vpow.pop %v1534
  %v1536 = vmul.f32 %v890, 1.442695
  %v1537 = vpow.pop %v1536
  %v1538 = vmul.f32 %v893, 1.442695
  %v1539 = vpow.pop %v1538
  %v1540 = vmul.f32 %v896, 1.442695
  %v1541 = vpow.pop %v1540
  %v1542 = vmul.f32 %v899, 1.442695
  %v1543 = vpow.pop %v1542
  %v1544 = vmul.f32 %v902, 1.442695
  %v1545 = vpow.pop %v1544
  %v1546 = vmul.f32 %v905, 1.442695
  %v1547 = vpow.pop %v1546
  %v1548 = vmul.f32 %v908, 1.442695
  %v1549 = vpow.pop %v1548
  %v1550 = vmul.f32 %v911, 1.442695
  %v1551 = vpow.pop %v1550
  %v1552 = vmul.f32 %v914, 1.442695
  %v1553 = vpow.pop %v1552
  %v1554 = vmul.f32 %v917, 1.442695
  %v1555 = vpow.pop %v1554
  %v1556 = vmul.f32 %v920, 1.442695
  %v1557 = vpow.pop %v1556
  %v1558 = vmul.f32 %v923, 1.442695
  %v1559 = vpow.pop %v1558
  %v1560 = vmul.f32 %v926, 1.442695
  %v1561 = vpow.pop %v1560
  %v1562 = vmul.f32 %v929, 1.442695
  %v1563 = vpow.pop %v1562
  %v1564 = vmul.f32 %v932, 1.442695
  %v1565 = vpow.pop %v1564
  %v1566 = vmul.f32 %v935, 1.442695
  %v1567 = vpow.pop %v1566
  %v1568 = vmul.f32 %v938, 1.442695
  %v1569 = vpow.pop %v1568
  %v1570 = vmul.f32 %v941, 1.442695
  %v1571 = vpow.pop %v1570
  %v1572 = vmul.f32 %v944, 1.442695
  %v1573 = vpow.pop %v1572
  %v1574 = vmul.f32 %v947, 1.442695
  %v1575 = vpow.pop %v1574
  %v1576 = vmul.f32 %v950, 1.442695
  %v1577 = vpow.pop %v1576
  %v1578 = vmul.f32 %v953, 1.442695
  %v1579 = vpow.pop %v1578
  %v1580 = vmul.f32 %v956, 1.442695
  %v1581 = vpow.pop %v1580
  %v1582 = vmul.f32 %v959, 1.442695
  %v1583 = vpow.pop %v1582
  %v1584 = vmul.f32 %v962, 1.442695
  %v1585 = vpow.pop %v1584
  %v1586 = vmul.f32 %v965, 1.442695
  %v1587 = vpow.pop %v1586
  %v1588 = vmul.f32 %v968, 1.442695
  %v1589 = vpow.pop %v1588
  %v1590 = vmul.f32 %v971, 1.442695
  %v1591 = vpow.pop %v1590
  %v1592 = vmul.f32 %v974, 1.442695
  %v1593 = vpow.pop %v1592
  %v1594 = vmul.f32 %v977, 1.442695
  %v1595 = vpow.pop %v1594
  %v1596 = vmul.f32 %v980, 1.442695
  %v1597 = vpow.pop %v1596
  %v1598 = vmul.f32 %v983, 1.442695
  %v1599 = vpow.pop %v1598
  %v1600 = vmul.f32 %v986, 1.442695
  %v1601 = vpow.pop %v1600
  %v1602 = vmul.f32 %v989, 1.442695
  %v1603 = vpow.pop %v1602
  %v1604 = vmul.f32 %v992, 1.442695
  %v1605 = vpow.pop %v1604
  %v1606 = vmul.f32 %v995, 1.442695
  %v1607 = vpow.pop %v1606
  %v1608 = vmul.f32 %v998, 1.442695
  %v1609 = vpow.pop %v1608
  %v1610 = vmul.f32 %v1001, 1.442695
  %v1611 = vpow.pop %v1610
  %v1612 = vmul.f32 %v1004, 1.442695
  %v1613 = vpow.pop %v1612
  %v1614 = vmul.f32 %v1007, 1.442695
  %v1615 = vpow.pop %v1614
  %v1616 = vmul.f32 %v1010, 1.442695
  %v1617 = vpow.pop %v1616
  %v1618 = vmul.f32 %v1013, 1.442695
  %v1619 = vpow.pop %v1618
  %v1620 = vmul.f32 %v1016, 1.442695
  %v1621 = vpow.pop %v1620
  %v1622 = vmul.f32 %v1019, 1.442695
  %v1623 = vpow.pop %v1622
  %v1624 = vmul.f32 %v1022, 1.442695
  %v1625 = vpow.pop %v1624
  %v1626 = vmul.f32 %v1025, 1.442695
  %v1627 = vpow.pop %v1626
  %v1628 = vmul.f32 %v1028, 1.442695
  %v1629 = vpow.pop %v1628
  %v1630 = vmul.f32 %v1031, 1.442695
  %v1631 = vpow.pop %v1630
  %v1632 = vmul.f32 %v1034, 1.442695
  %v1633 = vpow.pop %v1632
  %v1634 = vmul.f32 %v1037, 1.442695
  %v1635 = vpow.pop %v1634
  %v1636 = vmul.f32 %v1040, 1.442695
  %v1637 = vpow.pop %v1636
  %v1638 = vmul.f32 %v1043, 1.442695
  %v1639 = vpow.pop %v1638
  %v1640 = vmul.f32 %v1046, 1.442695
  %v1641 = vpow.pop %v1640
  %v1642 = vmul.f32 %v1049, 1.442695
  %v1643 = vpow.pop %v1642
  %v1644 = vmul.f32 %v1052, 1.442695
  %v1645 = vpow.pop %v1644
  %v1646 = vmul.f32 %v1055, 1.442695
  %v1647 = vpow.pop %v1646
  %v1648 = vmul.f32 %v1058, 1.442695
  %v1649 = vpow.pop %v1648
  %v1650 = vmul.f32 %v1061, 1.442695
  %v1651 = vpow.pop %v1650
  %v1652 = vmul.f32 %v1064, 1.442695
  %v1653 = vpow.pop %v1652
  %v1654 = vmul.f32 %v1067, 1.442695
  %v1655 = vpow.pop %v1654
  %v1656 = vmul.f32 %v1070, 1.442695
  %v1657 = vpow.pop %v1656
  %v1658 = vmul.f32 %v1073, 1.442695
  %v1659 = vpow.pop %v1658
  %v1660 = vmul.f32 %v1076, 1.442695
  %v1661 = vpow.pop %v1660
  %v1662 = vmul.f32 %v1079, 1.442695
  %v1663 = vpow.pop %v1662
  %v1664 = vmul.f32 %v1082, 1.442695
  %v1665 = vpow.pop %v1664
  %v1666 = vmul.f32 %v1085, 1.442695
  %v1667 = vpow.pop %v1666
  %v1668 = vmul.f32 %v1088, 1.442695
  %v1669 = vpow.pop %v1668
  %v1670 = vmul.f32 %v1091, 1.442695
  %v1671 = vpow.pop %v1670
  %v1672 = vmul.f32 %v1094, 1.442695
  %v1673 = vpow.pop %v1672
  %v1674 = vmul.f32 %v1097, 1.442695
  %v1675 = vpow.pop %v1674
  %v1676 = vmul.f32 %v1100, 1.442695
  %v1677 = vpow.pop %v1676
  %v1678 = vmul.f32 %v1103, 1.442695
  %v1679 = vpow.pop %v1678
  %v1680 = vmul.f32 %v1106, 1.442695
  %v1681 = vpow.pop %v1680
  %v1682 = vmul.f32 %v1109, 1.442695
  %v1683 = vpow.pop %v1682
  %v1684 = vmul.f32 %v1112, 1.442695
  %v1685 = vpow.pop %v1684
  %v1686 = vmul.f32 %v1115, 1.442695
  %v1687 = vpow.pop %v1686
  %v1688 = vmul.f32 %v1118, 1.442695
  %v1689 = vpow.pop %v1688
  %v1690 = vmul.f32 %v1121, 1.442695
  %v1691 = vpow.pop %v1690
  %v1692 = vmul.f32 %v1124, 1.442695
  %v1693 = vpow.pop %v1692
  %v1694 = vmul.f32 %v1127, 1.442695
  %v1695 = vpow.pop %v1694
  %v1696 = vmul.f32 %v1130, 1.442695
  %v1697 = vpow.pop %v1696
  %v1698 = vmul.f32 %v1133, 1.442695
  %v1699 = vpow.pop %v1698
  %v1700 = vmul.f32 %v1136, 1.442695
  %v1701 = vpow.pop %v1700
  %v1702 = vmul.f32 %v1139, 1.442695
  %v1703 = vpow.pop %v1702
  %v1704 = vmul.f32 %v1142, 1.442695
  %v1705 = vpow.pop %v1704
  %v1706 = vmul.f32 %v1145, 1.442695
  %v1707 = vpow.pop %v1706
  %v1708 = vmul.f32 %v1148, 1.442695
  %v1709 = vpow.pop %v1708
  %v1710 = vmul.f32 %v1151, 1.442695
  %v1711 = vpow.pop %v1710
  %v1712 = vmul.f32 %v1154, 1.442695
  %v1713 = vpow.pop %v1712
  %v1714 = vmul.f32 %v1157, 1.442695
  %v1715 = vpow.pop %v1714
  %v1716 = vmul.f32 %v1160, 1.442695
  %v1717 = vpow.pop %v1716
  %v1718 = vmul.f32 %v1163, 1.442695
  %v1719 = vpow.pop %v1718
  %v1720 = vmul.f32 %v1166, 1.442695
  %v1721 = vpow.pop %v1720
  %v1722 = vmul.f32 %v1169, 1.442695
  %v1723 = vpow.pop %v1722
  %v1724 = vmul.f32 %v1172, 1.442695
  %v1725 = vpow.pop %v1724
  %v1726 = vmul.f32 %v1175, 1.442695
  %v1727 = vpow.pop %v1726
  %v1728 = vmul.f32 %v1178, 1.442695
  %v1729 = vpow.pop %v1728
  %v1730 = vmul.f32 %v1181, 1.442695
  %v1731 = vpow.pop %v1730
  %v1732 = vmul.f32 %v1184, 1.442695
  %v1733 = vpow.pop %v1732
  %v1734 = vmul.f32 %v1187, 1.442695
  %v1735 = vpow.pop %v1734
  %v1736 = vmul.f32 %v1190, 1.442695
  %v1737 = vpow.pop %v1736
  %v1738 = vmul.f32 %v1193, 1.442695
  %v1739 = vpow.pop %v1738
  %v1740 = vmul.f32 %v1196, 1.442695
  %v1741 = vpow.pop %v1740
  %v1742 = vmul.f32 %v1199, 1.442695
  %v1743 = vpow.pop %v1742
  %v1744 = vmul.f32 %v1202, 1.442695
  %v1745 = vpow.pop %v1744
  %v1746 = vmul.f32 %v1205, 1.442695
  %v1747 = vpow.pop %v1746
  %v1748 = vmul.f32 %v1208, 1.442695
  %v1749 = vpow.pop %v1748
  %v1750 = vmul.f32 %v1211, 1.442695
  %v1751 = vpow.pop %v1750
  %v1752 = vmul.f32 %v1214, 1.442695
  %v1753 = vpow.pop %v1752
  %v1754 = vmul.f32 %v1217, 1.442695
  %v1755 = vpow.pop %v1754
  %v1756 = vmul.f32 %v1220, 1.442695
  %v1757 = vpow.pop %v1756
  %v1758 = vmul.f32 %v1223, 1.442695
  %v1759 = vpow.pop %v1758
  %v1760 = vmul.f32 %v1226, 1.442695
  %v1761 = vpow.pop %v1760
  %v1762 = vmul.f32 %v1229, 1.442695
  %v1763 = vpow.pop %v1762
  %v1764 = vmul.f32 %v1232, 1.442695
  %v1765 = vpow.pop %v1764
  %v1766 = vmul.f32 %v1235, 1.442695
  %v1767 = vpow.pop %v1766
  %v1768 = vmul.f32 %v1238, 1.442695
  %v1769 = vpow.pop %v1768
  %v1770 = vmul.f32 %v1241, 1.442695
  %v1771 = vpow.pop %v1770
  %v1772 = vmul.f32 %v1244, 1.442695
  %v1773 = vpow.pop %v1772
  %v1774 = vmul.f32 %v1247, 1.442695
  %v1775 = vpow.pop %v1774
  %v1776 = vmul.f32 %v1250, 1.442695
  %v1777 = vpow.pop %v1776
  %v1778 = vmul.f32 %v1253, 1.442695
  %v1779 = vpow.pop %v1778
  %v1780 = vmul.f32 %v1256, 1.442695
  %v1781 = vpow.pop %v1780
  %v1782 = vmul.f32 %v1259, 1.442695
  %v1783 = vpow.pop %v1782
  %v1784 = vmul.f32 %v1262, 1.442695
  %v1785 = vpow.pop %v1784
  %v1786 = vmul.f32 %v1265, 1.442695
  %v1787 = vpow.pop %v1786
  %v1788 = vmul.f32 %v1268, 1.442695
  %v1789 = vpow.pop %v1788
  %v1790 = vmul.f32 %v1271, 1.442695
  %v1791 = vpow.pop %v1790
  %v1792 = vmul.f32 %v1274, 1.442695
  %v1793 = vpow.pop %v1792
  %v1794 = vmul.f32 %v1277, 1.442695
  %v1795 = vpow.pop %v1794
  %v1796 = vmul.f32 %v1280, 1.442695
  %v1797 = vpow.pop %v1796
  %v1798 = vmul.f32 %v1283, 1.442695
  %v1799 = vpow.pop %v1798
  %v1800 = vmul.f32 %v1286, 1.442695
  %v1801 = vpow.pop %v1800
  %v1802 = vmul.f32 %v1289, 1.442695
  %v1803 = vpow.pop %v1802
  %v1804 = vmul.f32 %v1292, 1.442695
  %v1805 = vpow.pop %v1804
  %v1806 = vmul.f32 %v1295, 1.442695
  %v1807 = vpow.pop %v1806
  %v2064 = vlaneseq
  %v2065 = vand.u32 %v2064, 127
  %v2066 = vperm.slane %v1297, %v2065
  %v2067 = vperm.slane %v1299, %v2065
  %v2068 = vperm.slane %v1301, %v2065
  %v2069 = vperm.slane %v1303, %v2065
  %v2070 = vperm.slane %v1305, %v2065
  %v2071 = vperm.slane %v1307, %v2065
  %v2072 = vperm.slane %v1309, %v2065
  %v2073 = vperm.slane %v1311, %v2065
  %v2074 = vperm.slane %v1313, %v2065
  %v2075 = vperm.slane %v1315, %v2065
  %v2076 = vperm.slane %v1317, %v2065
  %v2077 = vperm.slane %v1319, %v2065
  %v2078 = vperm.slane %v1321, %v2065
  %v2079 = vperm.slane %v1323, %v2065
  %v2080 = vperm.slane %v1325, %v2065
  %v2081 = vperm.slane %v1327, %v2065
  %v2082 = vperm.slane %v1329, %v2065
  %v2083 = vperm.slane %v1331, %v2065
  %v2084 = vperm.slane %v1333, %v2065
  %v2085 = vperm.slane %v1335, %v2065
  %v2086 = vperm.slane %v1337, %v2065
  %v2087 = vperm.slane %v1339, %v2065
  %v2088 = vperm.slane %v1341, %v2065
  %v2089 = vperm.slane %v1343, %v2065
  %v2090 = vperm.slane %v1345, %v2065
  %v2091 = vperm.slane %v1347, %v2065
  %v2092 = vperm.slane %v1349, %v2065
  %v2093 = vperm.slane %v1351, %v2065
  %v2094 = vperm.slane %v1353, %v2065
  %v2095 = vperm.slane %v1355, %v2065
  %v2096 = vperm.slane %v1357, %v2065
  %v2097 = vperm.slane %v1359, %v2065
  %v2098 = vperm.slane %v1361, %v2065
  %v2099 = vperm.slane %v1363, %v2065
  %v2100 = vperm.slane %v1365, %v2065
  %v2101 = vperm.slane %v1367, %v2065
  %v2102 = vperm.slane %v1369, %v2065
  %v2103 = vperm.slane %v1371, %v2065
  %v2104 = vperm.slane %v1373, %v2065
  %v2105 = vperm.slane %v1375, %v2065
  %v2106 = vperm.slane %v1377, %v2065
  %v2107 = vperm.slane %v1379, %v2065
  %v2108 = vperm.slane %v1381, %v2065
  %v2109 = vperm.slane %v1383, %v2065
  %v2110 = vperm.slane %v1385, %v2065
  %v2111 = vperm.slane %v1387, %v2065
  %v2112 = vperm.slane %v1389, %v2065
  %v2113 = vperm.slane %v1391, %v2065
  %v2114 = vperm.slane %v1393, %v2065
  %v2115 = vperm.slane %v1395, %v2065
  %v2116 = vperm.slane %v1397, %v2065
  %v2117 = vperm.slane %v1399, %v2065
  %v2118 = vperm.slane %v1401, %v2065
  %v2119 = vperm.slane %v1403, %v2065
  %v2120 = vperm.slane %v1405, %v2065
  %v2121 = vperm.slane %v1407, %v2065
  %v2122 = vperm.slane %v1409, %v2065
  %v2123 = vperm.slane %v1411, %v2065
  %v2124 = vperm.slane %v1413, %v2065
  %v2125 = vperm.slane %v1415, %v2065
  %v2126 = vperm.slane %v1417, %v2065
  %v2127 = vperm.slane %v1419, %v2065
  %v2128 = vperm.slane %v1421, %v2065
  %v2129 = vperm.slane %v1423, %v2065
  %v2130 = vperm.slane %v1425, %v2065
  %v2131 = vperm.slane %v1427, %v2065
  %v2132 = vperm.slane %v1429, %v2065
  %v2133 = vperm.slane %v1431, %v2065
  %v2134 = vperm.slane %v1433, %v2065
  %v2135 = vperm.slane %v1435, %v2065
  %v2136 = vperm.slane %v1437, %v2065
  %v2137 = vperm.slane %v1439, %v2065
  %v2138 = vperm.slane %v1441, %v2065
  %v2139 = vperm.slane %v1443, %v2065
  %v2140 = vperm.slane %v1445, %v2065
  %v2141 = vperm.slane %v1447, %v2065
  %v2142 = vperm.slane %v1449, %v2065
  %v2143 = vperm.slane %v1451, %v2065
  %v2144 = vperm.slane %v1453, %v2065
  %v2145 = vperm.slane %v1455, %v2065
  %v2146 = vperm.slane %v1457, %v2065
  %v2147 = vperm.slane %v1459, %v2065
  %v2148 = vperm.slane %v1461, %v2065
  %v2149 = vperm.slane %v1463, %v2065
  %v2150 = vperm.slane %v1465, %v2065
  %v2151 = vperm.slane %v1467, %v2065
  %v2152 = vperm.slane %v1469, %v2065
  %v2153 = vperm.slane %v1471, %v2065
  %v2154 = vperm.slane %v1473, %v2065
  %v2155 = vperm.slane %v1475, %v2065
  %v2156 = vperm.slane %v1477, %v2065
  %v2157 = vperm.slane %v1479, %v2065
  %v2158 = vperm.slane %v1481, %v2065
  %v2159 = vperm.slane %v1483, %v2065
  %v2160 = vperm.slane %v1485, %v2065
  %v2161 = vperm.slane %v1487, %v2065
  %v2162 = vperm.slane %v1489, %v2065
  %v2163 = vperm.slane %v1491, %v2065
  %v2164 = vperm.slane %v1493, %v2065
  %v2165 = vperm.slane %v1495, %v2065
  %v2166 = vperm.slane %v1497, %v2065
  %v2167 = vperm.slane %v1499, %v2065
  %v2168 = vperm.slane %v1501, %v2065
  %v2169 = vperm.slane %v1503, %v2065
  %v2170 = vperm.slane %v1505, %v2065
  %v2171 = vperm.slane %v1507, %v2065
  %v2172 = vperm.slane %v1509, %v2065
  %v2173 = vperm.slane %v1511, %v2065
  %v2174 = vperm.slane %v1513, %v2065
  %v2175 = vperm.slane %v1515, %v2065
  %v2176 = vperm.slane %v1517, %v2065
  %v2177 = vperm.slane %v1519, %v2065
  %v2178 = vperm.slane %v1521, %v2065
  %v2179 = vperm.slane %v1523, %v2065
  %v2180 = vperm.slane %v1525, %v2065
  %v2181 = vperm.slane %v1527, %v2065
  %v2182 = vperm.slane %v1529, %v2065
  %v2183 = vperm.slane %v1531, %v2065
  %v2184 = vperm.slane %v1533, %v2065
  %v2185 = vperm.slane %v1535, %v2065
  %v2186 = vperm.slane %v1537, %v2065
  %v2187 = vperm.slane %v1539, %v2065
  %v2188 = vperm.slane %v1541, %v2065
  %v2189 = vperm.slane %v1543, %v2065
  %v2190 = vperm.slane %v1545, %v2065
  %v2191 = vperm.slane %v1547, %v2065
  %v2192 = vperm.slane %v1549, %v2065
  %v2193 = vperm.slane %v1551, %v2065
  %v2194 = vperm.slane %v1553, %v2065
  %v2195 = vperm.slane %v1555, %v2065
  %v2196 = vperm.slane %v1557, %v2065
  %v2197 = vperm.slane %v1559, %v2065
  %v2198 = vperm.slane %v1561, %v2065
  %v2199 = vperm.slane %v1563, %v2065
  %v2200 = vperm.slane %v1565, %v2065
  %v2201 = vperm.slane %v1567, %v2065
  %v2202 = vperm.slane %v1569, %v2065
  %v2203 = vperm.slane %v1571, %v2065
  %v2204 = vperm.slane %v1573, %v2065
  %v2205 = vperm.slane %v1575, %v2065
  %v2206 = vperm.slane %v1577, %v2065
  %v2207 = vperm.slane %v1579, %v2065
  %v2208 = vperm.slane %v1581, %v2065
  %v2209 = vperm.slane %v1583, %v2065
  %v2210 = vperm.slane %v1585, %v2065
  %v2211 = vperm.slane %v1587, %v2065
  %v2212 = vperm.slane %v1589, %v2065
  %v2213 = vperm.slane %v1591, %v2065
  %v2214 = vperm.slane %v1593, %v2065
  %v2215 = vperm.slane %v1595, %v2065
  %v2216 = vperm.slane %v1597, %v2065
  %v2217 = vperm.slane %v1599, %v2065
  %v2218 = vperm.slane %v1601, %v2065
  %v2219 = vperm.slane %v1603, %v2065
  %v2220 = vperm.slane %v1605, %v2065
  %v2221 = vperm.slane %v1607, %v2065
  %v2222 = vperm.slane %v1609, %v2065
  %v2223 = vperm.slane %v1611, %v2065
  %v2224 = vperm.slane %v1613, %v2065
  %v2225 = vperm.slane %v1615, %v2065
  %v2226 = vperm.slane %v1617, %v2065
  %v2227 = vperm.slane %v1619, %v2065
  %v2228 = vperm.slane %v1621, %v2065
  %v2229 = vperm.slane %v1623, %v2065
  %v2230 = vperm.slane %v1625, %v2065
  %v2231 = vperm.slane %v1627, %v2065
  %v2232 = vperm.slane %v1629, %v2065
  %v2233 = vperm.slane %v1631, %v2065
  %v2234 = vperm.slane %v1633, %v2065
  %v2235 = vperm.slane %v1635, %v2065
  %v2236 = vperm.slane %v1637, %v2065
  %v2237 = vperm.slane %v1639, %v2065
  %v2238 = vperm.slane %v1641, %v2065
  %v2239 = vperm.slane %v1643, %v2065
  %v2240 = vperm.slane %v1645, %v2065
  %v2241 = vperm.slane %v1647, %v2065
  %v2242 = vperm.slane %v1649, %v2065
  %v2243 = vperm.slane %v1651, %v2065
  %v2244 = vperm.slane %v1653, %v2065
  %v2245 = vperm.slane %v1655, %v2065
  %v2246 = vperm.slane %v1657, %v2065
  %v2247 = vperm.slane %v1659, %v2065
  %v2248 = vperm.slane %v1661, %v2065
  %v2249 = vperm.slane %v1663, %v2065
  %v2250 = vperm.slane %v1665, %v2065
  %v2251 = vperm.slane %v1667, %v2065
  %v2252 = vperm.slane %v1669, %v2065
  %v2253 = vperm.slane %v1671, %v2065
  %v2254 = vperm.slane %v1673, %v2065
  %v2255 = vperm.slane %v1675, %v2065
  %v2256 = vperm.slane %v1677, %v2065
  %v2257 = vperm.slane %v1679, %v2065
  %v2258 = vperm.slane %v1681, %v2065
  %v2259 = vperm.slane %v1683, %v2065
  %v2260 = vperm.slane %v1685, %v2065
  %v2261 = vperm.slane %v1687, %v2065
  %v2262 = vperm.slane %v1689, %v2065
  %v2263 = vperm.slane %v1691, %v2065
  %v2264 = vperm.slane %v1693, %v2065
  %v2265 = vperm.slane %v1695, %v2065
  %v2266 = vperm.slane %v1697, %v2065
  %v2267 = vperm.slane %v1699, %v2065
  %v2268 = vperm.slane %v1701, %v2065
  %v2269 = vperm.slane %v1703, %v2065
  %v2270 = vperm.slane %v1705, %v2065
  %v2271 = vperm.slane %v1707, %v2065
  %v2272 = vperm.slane %v1709, %v2065
  %v2273 = vperm.slane %v1711, %v2065
  %v2274 = vperm.slane %v1713, %v2065
  %v2275 = vperm.slane %v1715, %v2065
  %v2276 = vperm.slane %v1717, %v2065
  %v2277 = vperm.slane %v1719, %v2065
  %v2278 = vperm.slane %v1721, %v2065
  %v2279 = vperm.slane %v1723, %v2065
  %v2280 = vperm.slane %v1725, %v2065
  %v2281 = vperm.slane %v1727, %v2065
  %v2282 = vperm.slane %v1729, %v2065
  %v2283 = vperm.slane %v1731, %v2065
  %v2284 = vperm.slane %v1733, %v2065
  %v2285 = vperm.slane %v1735, %v2065
  %v2286 = vperm.slane %v1737, %v2065
  %v2287 = vperm.slane %v1739, %v2065
  %v2288 = vperm.slane %v1741, %v2065
  %v2289 = vperm.slane %v1743, %v2065
  %v2290 = vperm.slane %v1745, %v2065
  %v2291 = vperm.slane %v1747, %v2065
  %v2292 = vperm.slane %v1749, %v2065
  %v2293 = vperm.slane %v1751, %v2065
  %v2294 = vperm.slane %v1753, %v2065
  %v2295 = vperm.slane %v1755, %v2065
  %v2296 = vperm.slane %v1757, %v2065
  %v2297 = vperm.slane %v1759, %v2065
  %v2298 = vperm.slane %v1761, %v2065
  %v2299 = vperm.slane %v1763, %v2065
  %v2300 = vperm.slane %v1765, %v2065
  %v2301 = vperm.slane %v1767, %v2065
  %v2302 = vperm.slane %v1769, %v2065
  %v2303 = vperm.slane %v1771, %v2065
  %v2304 = vperm.slane %v1773, %v2065
  %v2305 = vperm.slane %v1775, %v2065
  %v2306 = vperm.slane %v1777, %v2065
  %v2307 = vperm.slane %v1779, %v2065
  %v2308 = vperm.slane %v1781, %v2065
  %v2309 = vperm.slane %v1783, %v2065
  %v2310 = vperm.slane %v1785, %v2065
  %v2311 = vperm.slane %v1787, %v2065
  %v2312 = vperm.slane %v1789, %v2065
  %v2313 = vperm.slane %v1791, %v2065
  %v2314 = vperm.slane %v1793, %v2065
  %v2315 = vperm.slane %v1795, %v2065
  %v2316 = vperm.slane %v1797, %v2065
  %v2317 = vperm.slane %v1799, %v2065
  %v2318 = vperm.slane %v1801, %v2065
  %v2319 = vperm.slane %v1803, %v2065
  %v2320 = vperm.slane %v1805, %v2065
  %v2321 = vperm.slane %v1807, %v2065
  %vm2322 = vcmask 1041409
  %v2323 = vsel %vm2322, %v2067, %v2066
  %vm2324 = vcmask 1042434
  %v2325 = vsel %vm2324, %v2068, %v2323
  %vm2326 = vcmask 1043459
  %v2327 = vsel %vm2326, %v2069, %v2325
  %vm2328 = vcmask 1044484
  %v2329 = vsel %vm2328, %v2070, %v2327
  %vm2330 = vcmask 1045509
  %v2331 = vsel %vm2330, %v2071, %v2329
  %vm2332 = vcmask 1046534
  %v2333 = vsel %vm2332, %v2072, %v2331
  %vm2334 = vcmask 1047559
  %v2335 = vsel %vm2334, %v2073, %v2333
  %v2336 = vsel %vm2322, %v2075, %v2074
  %v2337 = vsel %vm2324, %v2076, %v2336
  %v2338 = vsel %vm2326, %v2077, %v2337
  %v2339 = vsel %vm2328, %v2078, %v2338
  %v2340 = vsel %vm2330, %v2079, %v2339
  %v2341 = vsel %vm2332, %v2080, %v2340
  %v2342 = vsel %vm2334, %v2081, %v2341
  %v2343 = vsel %vm2322, %v2083, %v2082
  %v2344 = vsel %vm2324, %v2084, %v2343
  %v2345 = vsel %vm2326, %v2085, %v2344
  %v2346 = vsel %vm2328, %v2086, %v2345
  %v2347 = vsel %vm2330, %v2087, %v2346
  %v2348 = vsel %vm2332, %v2088, %v2347
  %v2349 = vsel %vm2334, %v2089, %v2348
  %v2350 = vsel %vm2322, %v2091, %v2090
  %v2351 = vsel %vm2324, %v2092, %v2350
  %v2352 = vsel %vm2326, %v2093, %v2351
  %v2353 = vsel %vm2328, %v2094, %v2352
  %v2354 = vsel %vm2330, %v2095, %v2353
  %v2355 = vsel %vm2332, %v2096, %v2354
  %v2356 = vsel %vm2334, %v2097, %v2355
  %v2357 = vsel %vm2322, %v2099, %v2098
  %v2358 = vsel %vm2324, %v2100, %v2357
  %v2359 = vsel %vm2326, %v2101, %v2358
  %v2360 = vsel %vm2328, %v2102, %v2359
  %v2361 = vsel %vm2330, %v2103, %v2360
  %v2362 = vsel %vm2332, %v2104, %v2361
  %v2363 = vsel %vm2334, %v2105, %v2362
  %v2364 = vsel %vm2322, %v2107, %v2106
  %v2365 = vsel %vm2324, %v2108, %v2364
  %v2366 = vsel %vm2326, %v2109, %v2365
  %v2367 = vsel %vm2328, %v2110, %v2366
  %v2368 = vsel %vm2330, %v2111, %v2367
  %v2369 = vsel %vm2332, %v2112, %v2368
  %v2370 = vsel %vm2334, %v2113, %v2369
  %v2371 = vsel %vm2322, %v2115, %v2114
  %v2372 = vsel %vm2324, %v2116, %v2371
  %v2373 = vsel %vm2326, %v2117, %v2372
  %v2374 = vsel %vm2328, %v2118, %v2373
  %v2375 = vsel %vm2330, %v2119, %v2374
  %v2376 = vsel %vm2332, %v2120, %v2375
  %v2377 = vsel %vm2334, %v2121, %v2376
  %v2378 = vsel %vm2322, %v2123, %v2122
  %v2379 = vsel %vm2324, %v2124, %v2378
  %v2380 = vsel %vm2326, %v2125, %v2379
  %v2381 = vsel %vm2328, %v2126, %v2380
  %v2382 = vsel %vm2330, %v2127, %v2381
  %v2383 = vsel %vm2332, %v2128, %v2382
  %v2384 = vsel %vm2334, %v2129, %v2383
  %v2385 = vsel %vm2322, %v2131, %v2130
  %v2386 = vsel %vm2324, %v2132, %v2385
  %v2387 = vsel %vm2326, %v2133, %v2386
  %v2388 = vsel %vm2328, %v2134, %v2387
  %v2389 = vsel %vm2330, %v2135, %v2388
  %v2390 = vsel %vm2332, %v2136, %v2389
  %v2391 = vsel %vm2334, %v2137, %v2390
  %v2392 = vsel %vm2322, %v2139, %v2138
  %v2393 = vsel %vm2324, %v2140, %v2392
  %v2394 = vsel %vm2326, %v2141, %v2393
  %v2395 = vsel %vm2328, %v2142, %v2394
  %v2396 = vsel %vm2330, %v2143, %v2395
  %v2397 = vsel %vm2332, %v2144, %v2396
  %v2398 = vsel %vm2334, %v2145, %v2397
  %v2399 = vsel %vm2322, %v2147, %v2146
  %v2400 = vsel %vm2324, %v2148, %v2399
  %v2401 = vsel %vm2326, %v2149, %v2400
  %v2402 = vsel %vm2328, %v2150, %v2401
  %v2403 = vsel %vm2330, %v2151, %v2402
  %v2404 = vsel %vm2332, %v2152, %v2403
  %v2405 = vsel %vm2334, %v2153, %v2404
  %v2406 = vsel %vm2322, %v2155, %v2154
  %v2407 = vsel %vm2324, %v2156, %v2406
  %v2408 = vsel %vm2326, %v2157, %v2407
  %v2409 = vsel %vm2328, %v2158, %v2408
  %v2410 = vsel %vm2330, %v2159, %v2409
  %v2411 = vsel %vm2332, %v2160, %v2410
  %v2412 = vsel %vm2334, %v2161, %v2411
  %v2413 = vsel %vm2322, %v2163, %v2162
  %v2414 = vsel %vm2324, %v2164, %v2413
  %v2415 = vsel %vm2326, %v2165, %v2414
  %v2416 = vsel %vm2328, %v2166, %v2415
  %v2417 = vsel %vm2330, %v2167, %v2416
  %v2418 = vsel %vm2332, %v2168, %v2417
  %v2419 = vsel %vm2334, %v2169, %v2418
  %v2420 = vsel %vm2322, %v2171, %v2170
  %v2421 = vsel %vm2324, %v2172, %v2420
  %v2422 = vsel %vm2326, %v2173, %v2421
  %v2423 = vsel %vm2328, %v2174, %v2422
  %v2424 = vsel %vm2330, %v2175, %v2423
  %v2425 = vsel %vm2332, %v2176, %v2424
  %v2426 = vsel %vm2334, %v2177, %v2425
  %v2427 = vsel %vm2322, %v2179, %v2178
  %v2428 = vsel %vm2324, %v2180, %v2427
  %v2429 = vsel %vm2326, %v2181, %v2428
  %v2430 = vsel %vm2328, %v2182, %v2429
  %v2431 = vsel %vm2330, %v2183, %v2430
  %v2432 = vsel %vm2332, %v2184, %v2431
  %v2433 = vsel %vm2334, %v2185, %v2432
  %v2434 = vsel %vm2322, %v2187, %v2186
  %v2435 = vsel %vm2324, %v2188, %v2434
  %v2436 = vsel %vm2326, %v2189, %v2435
  %v2437 = vsel %vm2328, %v2190, %v2436
  %v2438 = vsel %vm2330, %v2191, %v2437
  %v2439 = vsel %vm2332, %v2192, %v2438
  %v2440 = vsel %vm2334, %v2193, %v2439
  %v2441 = vsel %vm2322, %v2195, %v2194
  %v2442 = vsel %vm2324, %v2196, %v2441
  %v2443 = vsel %vm2326, %v2197, %v2442
  %v2444 = vsel %vm2328, %v2198, %v2443
  %v2445 = vsel %vm2330, %v2199, %v2444
  %v2446 = vsel %vm2332, %v2200, %v2445
  %v2447 = vsel %vm2334, %v2201, %v2446
  %v2448 = vsel %vm2322, %v2203, %v2202
  %v2449 = vsel %vm2324, %v2204, %v2448
  %v2450 = vsel %vm2326, %v2205, %v2449
  %v2451 = vsel %vm2328, %v2206, %v2450
  %v2452 = vsel %vm2330, %v2207, %v2451
  %v2453 = vsel %vm2332, %v2208, %v2452
  %v2454 = vsel %vm2334, %v2209, %v2453
  %v2455 = vsel %vm2322, %v2211, %v2210
  %v2456 = vsel %vm2324, %v2212, %v2455
  %v2457 = vsel %vm2326, %v2213, %v2456
  %v2458 = vsel %vm2328, %v2214, %v2457
  %v2459 = vsel %vm2330, %v2215, %v2458
  %v2460 = vsel %vm2332, %v2216, %v2459
  %v2461 = vsel %vm2334, %v2217, %v2460
  %v2462 = vsel %vm2322, %v2219, %v2218
  %v2463 = vsel %vm2324, %v2220, %v2462
  %v2464 = vsel %vm2326, %v2221, %v2463
  %v2465 = vsel %vm2328, %v2222, %v2464
  %v2466 = vsel %vm2330, %v2223, %v2465
  %v2467 = vsel %vm2332, %v2224, %v2466
  %v2468 = vsel %vm2334, %v2225, %v2467
  %v2469 = vsel %vm2322, %v2227, %v2226
  %v2470 = vsel %vm2324, %v2228, %v2469
  %v2471 = vsel %vm2326, %v2229, %v2470
  %v2472 = vsel %vm2328, %v2230, %v2471
  %v2473 = vsel %vm2330, %v2231, %v2472
  %v2474 = vsel %vm2332, %v2232, %v2473
  %v2475 = vsel %vm2334, %v2233, %v2474
  %v2476 = vsel %vm2322, %v2235, %v2234
  %v2477 = vsel %vm2324, %v2236, %v2476
  %v2478 = vsel %vm2326, %v2237, %v2477
  %v2479 = vsel %vm2328, %v2238, %v2478
  %v2480 = vsel %vm2330, %v2239, %v2479
  %v2481 = vsel %vm2332, %v2240, %v2480
  %v2482 = vsel %vm2334, %v2241, %v2481
  %v2483 = vsel %vm2322, %v2243, %v2242
  %v2484 = vsel %vm2324, %v2244, %v2483
  %v2485 = vsel %vm2326, %v2245, %v2484
  %v2486 = vsel %vm2328, %v2246, %v2485
  %v2487 = vsel %vm2330, %v2247, %v2486
  %v2488 = vsel %vm2332, %v2248, %v2487
  %v2489 = vsel %vm2334, %v2249, %v2488
  %v2490 = vsel %vm2322, %v2251, %v2250
  %v2491 = vsel %vm2324, %v2252, %v2490
  %v2492 = vsel %vm2326, %v2253, %v2491
  %v2493 = vsel %vm2328, %v2254, %v2492
  %v2494 = vsel %vm2330, %v2255, %v2493
  %v2495 = vsel %vm2332, %v2256, %v2494
  %v2496 = vsel %vm2334, %v2257, %v2495
  %v2497 = vsel %vm2322, %v2259, %v2258
  %v2498 = vsel %vm2324, %v2260, %v2497
  %v2499 = vsel %vm2326, %v2261, %v2498
  %v2500 = vsel %vm2328, %v2262, %v2499
  %v2501 = vsel %vm2330, %v2263, %v2500
  %v2502 = vsel %vm2332, %v2264, %v2501
  %v2503 = vsel %vm2334, %v2265, %v2502
  %v2504 = vsel %vm2322, %v2267, %v2266
  %v2505 = vsel %vm2324, %v2268, %v2504
  %v2506 = vsel %vm2326, %v2269, %v2505
  %v2507 = vsel %vm2328, %v2270, %v2506
  %v2508 = vsel %vm2330, %v2271, %v2507
  %v2509 = vsel %vm2332, %v2272, %v2508
  %v2510 = vsel %vm2334, %v2273, %v2509
  %v2511 = vsel %vm2322, %v2275, %v2274
  %v2512 = vsel %vm2324, %v2276, %v2511
  %v2513 = vsel %vm2326, %v2277, %v2512
  %v2514 = vsel %vm2328, %v2278, %v2513
  %v2515 = vsel %vm2330, %v2279, %v2514
  %v2516 = vsel %vm2332, %v2280, %v2515
  %v2517 = vsel %vm2334, %v2281, %v2516
  %v2518 = vsel %vm2322, %v2283, %v2282
  %v2519 = vsel %vm2324, %v2284, %v2518
  %v2520 = vsel %vm2326, %v2285, %v2519
  %v2521 = vsel %vm2328, %v2286, %v2520
  %v2522 = vsel %vm2330, %v2287, %v2521
  %v2523 = vsel %vm2332, %v2288, %v2522
  %v2524 = vsel %vm2334, %v2289, %v2523
  %v2525 = vsel %vm2322, %v2291, %v2290
  %v2526 = vsel %vm2324, %v2292, %v2525
  %v2527 = vsel %vm2326, %v2293, %v2526
  %v2528 = vsel %vm2328, %v2294, %v2527
  %v2529 = vsel %vm2330, %v2295, %v2528
  %v2530 = vsel %vm2332, %v2296, %v2529
  %v2531 = vsel %vm2334, %v2297, %v2530
  %v2532 = vsel %vm2322, %v2299, %v2298
  %v2533 = vsel %vm2324, %v2300, %v2532
  %v2534 = vsel %vm2326, %v2301, %v2533
  %v2535 = vsel %vm2328, %v2302, %v2534
  %v2536 = vsel %vm2330, %v2303, %v2535
  %v2537 = vsel %vm2332, %v2304, %v2536
  %v2538 = vsel %vm2334, %v2305, %v2537
  %v2539 = vsel %vm2322, %v2307, %v2306
  %v2540 = vsel %vm2324, %v2308, %v2539
  %v2541 = vsel %vm2326, %v2309, %v2540
  %v2542 = vsel %vm2328, %v2310, %v2541
  %v2543 = vsel %vm2330, %v2311, %v2542
  %v2544 = vsel %vm2332, %v2312, %v2543
  %v2545 = vsel %vm2334, %v2313, %v2544
  %v2546 = vsel %vm2322, %v2315, %v2314
  %v2547 = vsel %vm2324, %v2316, %v2546
  %v2548 = vsel %vm2326, %v2317, %v2547
  %v2549 = vsel %vm2328, %v2318, %v2548
  %v2550 = vsel %vm2330, %v2319, %v2549
  %v2551 = vsel %vm2332, %v2320, %v2550
  %v2552 = vsel %vm2334, %v2321, %v2551
  %vm2585 = vcmask 64512
  %2586 = vst.msk [vmem:[%s2] sm:$0xff] %vm2585, %v2335
  %2587 = vst.msk [vmem:[%s2 + $0x8] sm:$0xff] %vm2585, %v2342
  %2588 = vst.msk [vmem:[%s2 + $0x10] sm:$0xff] %vm2585, %v2349
  %2589 = vst.msk [vmem:[%s2 + $0x18] sm:$0xff] %vm2585, %v2356
  %2590 = vst.msk [vmem:[%s2 + $0x20] sm:$0xff] %vm2585, %v2363
  %2591 = vst.msk [vmem:[%s2 + $0x28] sm:$0xff] %vm2585, %v2370
  %2592 = vst.msk [vmem:[%s2 + $0x30] sm:$0xff] %vm2585, %v2377
  %2593 = vst.msk [vmem:[%s2 + $0x38] sm:$0xff] %vm2585, %v2384
  %2594 = vst.msk [vmem:[%s2 + $0x40] sm:$0xff] %vm2585, %v2391
  %2595 = vst.msk [vmem:[%s2 + $0x48] sm:$0xff] %vm2585, %v2398
  %2596 = vst.msk [vmem:[%s2 + $0x50] sm:$0xff] %vm2585, %v2405
  %2597 = vst.msk [vmem:[%s2 + $0x58] sm:$0xff] %vm2585, %v2412
  %2598 = vst.msk [vmem:[%s2 + $0x60] sm:$0xff] %vm2585, %v2419
  %2599 = vst.msk [vmem:[%s2 + $0x68] sm:$0xff] %vm2585, %v2426
  %2600 = vst.msk [vmem:[%s2 + $0x70] sm:$0xff] %vm2585, %v2433
  %2601 = vst.msk [vmem:[%s2 + $0x78] sm:$0xff] %vm2585, %v2440
  %2602 = vst.msk [vmem:[%s2 + $0x80] sm:$0xff] %vm2585, %v2447
  %2603 = vst.msk [vmem:[%s2 + $0x88] sm:$0xff] %vm2585, %v2454
  %2604 = vst.msk [vmem:[%s2 + $0x90] sm:$0xff] %vm2585, %v2461
  %2605 = vst.msk [vmem:[%s2 + $0x98] sm:$0xff] %vm2585, %v2468
  %2606 = vst.msk [vmem:[%s2 + $0xa0] sm:$0xff] %vm2585, %v2475
  %2607 = vst.msk [vmem:[%s2 + $0xa8] sm:$0xff] %vm2585, %v2482
  %2608 = vst.msk [vmem:[%s2 + $0xb0] sm:$0xff] %vm2585, %v2489
  %2609 = vst.msk [vmem:[%s2 + $0xb8] sm:$0xff] %vm2585, %v2496
  %2610 = vst.msk [vmem:[%s2 + $0xc0] sm:$0xff] %vm2585, %v2503
  %2611 = vst.msk [vmem:[%s2 + $0xc8] sm:$0xff] %vm2585, %v2510
  %2612 = vst.msk [vmem:[%s2 + $0xd0] sm:$0xff] %vm2585, %v2517
  %2613 = vst.msk [vmem:[%s2 + $0xd8] sm:$0xff] %vm2585, %v2524
  %2614 = vst.msk [vmem:[%s2 + $0xe0] sm:$0xff] %vm2585, %v2531
  %2615 = vst.msk [vmem:[%s2 + $0xe8] sm:$0xff] %vm2585, %v2538
  %2616 = vst.msk [vmem:[%s2 + $0xf0] sm:$0xff] %vm2585, %v2545
  %2617 = vst.msk [vmem:[%s2 + $0xf8] sm:$0xff] %vm2585, %v2552
  // Predicated region
  $region10: #{tpu_custom_call.1} parent=0 // pred_check
    _
  $region11: #{tpu_custom_call.1} parent=0 // pred_check_branch
    %2619 = sbr.rel (0) target = $region13
  $region12: #{tpu_custom_call.1} parent=0 // pred_region
    _
  $region13: #{tpu_custom_call.1} parent=0 // pred_fallthru
    _
  // Predicated region
  $region14: #{tpu_custom_call.1} parent=0 // pred_check
    _
  $region15: #{tpu_custom_call.1} parent=0 // pred_check_branch
    %2621 = sbr.rel (0) target = $region17
  $region16: #{tpu_custom_call.1} parent=0 // pred_region
    _
  $region17: #{tpu_custom_call.1} parent=0 // pred_fallthru
    _

</llo_original>
